<compile_context>
chip_gen: v5e
topology: v5e:2x2
jax: 0.10.0
libtpu: 0.0.40
codegen_flags: <defaults>
</compile_context>

<pallas_src>
import functools

import jax
import jax.numpy as jnp
from jax.experimental import pallas as pl
from jax.experimental.pallas import tpu as pltpu

# Above the default scoped VMEM limit everywhere, below v7x's 64 MiB physical.
_VMEM_LIMIT = 48 * 1024 * 1024


def _round_up(x, m):
    return (x + m - 1) // m * m


# ----------------------------------------------------------------------------
# Fused matmul + affine + activation (1x1 convs, final head)
# ----------------------------------------------------------------------------
def _matmul_affine_kernel(x_ref, w_ref, scale_ref, shift_ref, o_ref, acc_ref,
                          *, activation):
    k = pl.program_id(2)

    @pl.when(k == 0)
    def _():
        acc_ref[...] = jnp.zeros_like(acc_ref)

    acc_ref[...] += jnp.dot(x_ref[...], w_ref[...],
                            preferred_element_type=jnp.float32)

    @pl.when(k == pl.num_programs(2) - 1)
    def _():
        y = acc_ref[...] * scale_ref[...] + shift_ref[...]
        if activation == "relu":
            y = jnp.maximum(y, 0.0)
        elif activation == "sigmoid":
            y = jax.nn.sigmoid(y)
        o_ref[...] = y.astype(o_ref.dtype)


def matmul_affine(x, w, scale, shift, activation="none",
                  out_dtype=jnp.bfloat16, tm=512, tn=256, tk=512):
    """out = act((x @ w) * scale + shift); x:(M,K) w:(K,N) scale/shift:(N,).

    bf16 operands on the MXU, fp32 accumulator + fp32 epilogue.  Tiles adapt
    to the real M/N/K so the tiny deep-decoder matmuls (M as small as 2-8,
    K as small as 3) are not padded out to 128/512.
    """
    M, K = x.shape
    _, N = w.shape
    tm_eff = min(tm, _round_up(M, 8))
    tk_eff = min(tk, _round_up(K, 128))
    tn_eff = min(tn, _round_up(N, 128))
    Mp = _round_up(M, tm_eff)
    Kp = _round_up(K, tk_eff)
    Np = _round_up(N, tn_eff)
    # Keep >=2 parallel output tiles when M collapses to a single tile so both
    # v7x TensorCores (megacore) still get work on the deep decoder levels.
    if Mp == tm_eff and Np == tn_eff and Np > 128:
        tn_eff = max(128, (Np // 2) // 128 * 128)
        Np = _round_up(N, tn_eff)

    xp = jnp.pad(x.astype(jnp.bfloat16), ((0, Mp - M), (0, Kp - K)))
    wp = jnp.pad(w.astype(jnp.bfloat16), ((0, Kp - K), (0, Np - N)))
    sp = jnp.pad(scale.astype(jnp.float32).reshape(1, N), ((0, 0), (0, Np - N)))
    bp = jnp.pad(shift.astype(jnp.float32).reshape(1, N), ((0, 0), (0, Np - N)))

    out = pl.pallas_call(
        functools.partial(_matmul_affine_kernel, activation=activation),
        out_shape=jax.ShapeDtypeStruct((Mp, Np), out_dtype),
        grid_spec=pltpu.PrefetchScalarGridSpec(
            num_scalar_prefetch=0,
            grid=(Mp // tm_eff, Np // tn_eff, Kp // tk_eff),
            in_specs=[
                pl.BlockSpec((tm_eff, tk_eff), lambda i, j, k: (i, k)),
                pl.BlockSpec((tk_eff, tn_eff), lambda i, j, k: (k, j)),
                pl.BlockSpec((1, tn_eff), lambda i, j, k: (0, j)),
                pl.BlockSpec((1, tn_eff), lambda i, j, k: (0, j)),
            ],
            out_specs=pl.BlockSpec((tm_eff, tn_eff), lambda i, j, k: (i, j)),
            scratch_shapes=[pltpu.VMEM((tm_eff, tn_eff), jnp.float32)],
        ),
        compiler_params=pltpu.CompilerParams(
            dimension_semantics=("parallel", "parallel", "arbitrary"),
            vmem_limit_bytes=_VMEM_LIMIT),
    )(xp, wp, sp, bp)
    return out[:M, :N]


# ----------------------------------------------------------------------------
# Direct 3x3 'same' conv + BN + ReLU (no HBM im2col)
# ----------------------------------------------------------------------------
def _conv3x3_kernel(x_ref, w_ref, scale_ref, shift_ref, o_ref, *, H, W,
                    activation):
    # x_ref: (1, H+2, W+2, Cin)   w_ref: (3, 3, Cin, TN)
    # scale_ref/shift_ref: (1, TN)   o_ref: (1, H, W, TN)
    scale = scale_ref[...]
    shift = shift_ref[...]
    tn = o_ref.shape[-1]
    for h in range(H):                      # H is small (<=32) and static
        acc = jnp.zeros((W, tn), jnp.float32)
        for kh in range(3):
            row = x_ref[0, h + kh]          # (W+2, Cin), loaded once per tap row
            for kw in range(3):
                acc = acc + jnp.dot(row[kw:kw + W, :], w_ref[kh, kw],
                                    preferred_element_type=jnp.float32)
        y = acc * scale + shift
        if activation == "relu":
            y = jnp.maximum(y, 0.0)
        elif activation == "sigmoid":
            y = jax.nn.sigmoid(y)
        o_ref[0, h] = y.astype(o_ref.dtype)


def conv3x3_same_affine(x, w, scale, shift, activation,
                        out_dtype=jnp.bfloat16):
    # x: (B,H,W,Cin), w: (3,3,Cin,Cout)
    B, H, W, Cin = x.shape
    Cout = w.shape[-1]
    tn = Cout if Cout <= 256 else 256
    if Cout % tn:
        tn = Cout
    ncout = Cout // tn

    xp = jnp.pad(x.astype(jnp.bfloat16), ((0, 0), (1, 1), (1, 1), (0, 0)))
    wb = w.astype(jnp.bfloat16)
    sp = scale.astype(jnp.float32).reshape(1, Cout)
    bp = shift.astype(jnp.float32).reshape(1, Cout)

    out = pl.pallas_call(
        functools.partial(_conv3x3_kernel, H=H, W=W, activation=activation),
        out_shape=jax.ShapeDtypeStruct((B, H, W, Cout), out_dtype),
        grid=(ncout, B),   # b fastest -> weight tile reused across the batch
        in_specs=[
            pl.BlockSpec((1, H + 2, W + 2, Cin), lambda j, b: (b, 0, 0, 0)),
            pl.BlockSpec((3, 3, Cin, tn), lambda j, b: (0, 0, 0, j)),
            pl.BlockSpec((1, tn), lambda j, b: (0, j)),
            pl.BlockSpec((1, tn), lambda j, b: (0, j)),
        ],
        out_specs=pl.BlockSpec((1, H, W, tn), lambda j, b: (b, 0, 0, j)),
        compiler_params=pltpu.CompilerParams(
            dimension_semantics=("parallel", "parallel"),
            vmem_limit_bytes=_VMEM_LIMIT),
    )(xp, wb, sp, bp)
    return out


# ----------------------------------------------------------------------------
# ConvTranspose2d(kernel=2, stride=2), pixel shuffle fused into output layout
# ----------------------------------------------------------------------------
def _convT2x2_kernel(x_ref, w_ref, b_ref, o_ref, *, H, W):
    # x_ref: (1, H, W, Cin)   w_ref: (2, Cin, 2*Cout)   b_ref: (1, 2*Cout)
    # o_ref: (1, 2H, W, 2*Cout); the dw interleave is a free trailing-dim
    # reshape outside ((W, 2*Cout) row-major == (2W, Cout)).
    bias = b_ref[...]
    for h in range(H):
        xrow = x_ref[0, h]                              # (W, Cin)
        for dh in range(2):
            y = jnp.dot(xrow, w_ref[dh],
                        preferred_element_type=jnp.float32) + bias
            o_ref[0, 2 * h + dh] = y.astype(o_ref.dtype)


def conv_transpose_2x2_s2(x, w, bias, out_dtype=jnp.bfloat16):
    # x: (B,H,W,Cin), w: (Cin,2,2,Cout)  (torch weight (Cin,Cout,2,2) permuted)
    B, H, W, Cin = x.shape
    Cout = w.shape[-1]
    # (Cin,2,2,Cout) -> (2[dh], Cin, 2*Cout) with column index dw*Cout + c
    wt = jnp.transpose(w, (1, 0, 2, 3)).reshape(2, Cin, 2 * Cout)
    wt = wt.astype(jnp.bfloat16)
    bt = jnp.tile(bias.astype(jnp.float32), 2).reshape(1, 2 * Cout)

    out = pl.pallas_call(
        functools.partial(_convT2x2_kernel, H=H, W=W),
        out_shape=jax.ShapeDtypeStruct((B, 2 * H, W, 2 * Cout), out_dtype),
        grid=(B,),
        in_specs=[
            pl.BlockSpec((1, H, W, Cin), lambda b: (b, 0, 0, 0)),
            pl.BlockSpec((2, Cin, 2 * Cout), lambda b: (0, 0, 0)),
            pl.BlockSpec((1, 2 * Cout), lambda b: (0, 0)),
        ],
        out_specs=pl.BlockSpec((1, 2 * H, W, 2 * Cout), lambda b: (b, 0, 0, 0)),
        compiler_params=pltpu.CompilerParams(
            dimension_semantics=("parallel",),
            vmem_limit_bytes=_VMEM_LIMIT),
    )(x.astype(jnp.bfloat16), wt, bt)
    # Free reshape: (..., W, 2*Cout) -> (..., 2W, Cout) interleaves dw into W.
    return out.reshape(B, 2 * H, 2 * W, Cout)


# ----------------------------------------------------------------------------
# Siamese thresholding: where(|a - b| <= thr, 0, a)
# ----------------------------------------------------------------------------
def _thresh_kernel(a_ref, b_ref, o_ref, *, thr):
    a = a_ref[...]
    d = jnp.abs(a.astype(jnp.float32) - b_ref[...].astype(jnp.float32))
    o_ref[...] = jnp.where(d <= thr, jnp.zeros_like(a), a)


def threshold_diff(a, b, thr):
    """torch.where(|a - b| <= thr, 0, a), elementwise, large lane-dense blocks."""
    shape = a.shape
    C = shape[-1]
    n = a.size
    b = b.astype(a.dtype)
    if C % 128 == 0:                        # natural channels-last layout
        a2, b2 = a.reshape(-1, C), b.reshape(-1, C)
    elif n % 128 == 0:                      # free reshape to 128 dense lanes
        a2, b2 = a.reshape(-1, 128), b.reshape(-1, 128)
    else:                                   # rare fallback: pad flat
        npad = _round_up(n, 128)
        a2 = jnp.pad(a.reshape(-1), (0, npad - n)).reshape(-1, 128)
        b2 = jnp.pad(b.reshape(-1), (0, npad - n)).reshape(-1, 128)
    rows, cols = a2.shape
    block_rows = min(1024, _round_up(rows, 8))
    rows_p = _round_up(rows, block_rows)
    if rows_p != rows:
        a2 = jnp.pad(a2, ((0, rows_p - rows), (0, 0)))
        b2 = jnp.pad(b2, ((0, rows_p - rows), (0, 0)))
    out = pl.pallas_call(
        functools.partial(_thresh_kernel, thr=float(thr)),
        out_shape=jax.ShapeDtypeStruct((rows_p, cols), a.dtype),
        grid=(rows_p // block_rows,),
        in_specs=[pl.BlockSpec((block_rows, cols), lambda i: (i, 0)),
                  pl.BlockSpec((block_rows, cols), lambda i: (i, 0))],
        out_specs=pl.BlockSpec((block_rows, cols), lambda i: (i, 0)),
        compiler_params=pltpu.CompilerParams(
            dimension_semantics=("parallel",)),
    )(a2, b2)
    return out.reshape(-1)[:n].reshape(shape)


# ----------------------------------------------------------------------------
# Conv wrappers (thin glue; hot path = Pallas kernels above)
# ----------------------------------------------------------------------------
def conv1x1_affine(x, w, scale, shift, activation, out_dtype=jnp.bfloat16):
    # x: (B,H,W,Cin), w: (Cin, Cout)
    B, H, W, Cin = x.shape
    Cout = w.shape[1]
    out = matmul_affine(x.reshape(-1, Cin), w, scale, shift, activation,
                        out_dtype=out_dtype)
    return out.reshape(B, H, W, Cout)


# ----------------------------------------------------------------------------
# Parameter construction (deterministic, synthetic)
# ----------------------------------------------------------------------------
_BN_EPS = 1e-5


def _init_conv(key, kh, kw, cin, cout):
    kw_, kb_ = jax.random.split(key)
    fan_in = kh * kw * cin
    w = jax.random.normal(kw_, (kh, kw, cin, cout), jnp.float32) / jnp.sqrt(fan_in)
    b = 0.01 * jax.random.normal(kb_, (cout,), jnp.float32)
    return w, b


def _bn_identity_affine(cout):
    # gamma=1, beta=0, running_mean=0, running_var=1 (PyTorch defaults, eval)
    scale = jnp.full((cout,), 1.0 / jnp.sqrt(1.0 + _BN_EPS), jnp.float32)
    shift = jnp.zeros((cout,), jnp.float32)
    return scale, shift


def _init_conv_block(key, k, cin, cout):
    w, b = _init_conv(key, k, k, cin, cout)
    bn_scale, bn_shift = _bn_identity_affine(cout)
    # Fold conv bias + BN into one affine epilogue: (x@W)*scale + (b*scale+shift)
    return {"k": k, "w": w, "scale": bn_scale, "shift": b * bn_scale + bn_shift}


def conv_block_apply(p, x, out_dtype=jnp.bfloat16):
    if p["k"] == 1:
        return conv1x1_affine(x, p["w"][0, 0], p["scale"], p["shift"], "relu",
                              out_dtype=out_dtype)
    return conv3x3_same_affine(x, p["w"], p["scale"], p["shift"], "relu",
                               out_dtype=out_dtype)


def _init_upsampling_block(key, cin_down, cin_path, reduce_to):
    k1, k2, k3, k4, k5 = jax.random.split(key, 5)
    up_w = jax.random.normal(k2, (cin_down, 2, 2, reduce_to),
                             jnp.float32) / jnp.sqrt(4.0 * cin_down)
    up_b = 0.01 * jax.random.normal(k5, (reduce_to,), jnp.float32)
    return {
        "conv1": _init_conv_block(k1, 1, cin_path, reduce_to),
        "up_w": up_w,
        "up_b": up_b,
        "conv2": _init_conv_block(k3, 3, reduce_to * 2, reduce_to),
        "conv3": _init_conv_block(k4, 3, reduce_to, reduce_to),
    }


def upsampling_block_apply(p, contract_path, x):
    cp = conv_block_apply(p["conv1"], contract_path)
    up = conv_transpose_2x2_s2(x, p["up_w"], p["up_b"])
    cat = jnp.concatenate([cp, up], axis=-1)
    cat = conv_block_apply(p["conv2"], cat)
    cat = conv_block_apply(p["conv3"], cat)
    return cat


# ----------------------------------------------------------------------------
# SiamThresh model
# ----------------------------------------------------------------------------
_BACKBONE_SPEC = [  # (downsample factor, channels) for layer1..layer5
    (2, 24), (4, 48), (8, 256), (16, 960), (32, 1280)]


class SiamThreshPallas:
    def __init__(self, out_channels, key, thresholds=None):
        self.thresholds = thresholds or {
            "threshold0": 0.4, "threshold1": 0.6, "threshold2": 0.8,
            "threshold3": 1.0, "threshold4": 1.2, "threshold5": 1.4}
        keys = jax.random.split(key, 12)
        # synthetic backbone stand-in (see TODO(synk) at top of file)
        self.backbone = {
            f"layer{i}": _init_conv_block(keys[i - 1], 1, 3, c)
            for i, (_, c) in enumerate(_BACKBONE_SPEC, start=1)}
        self.up1 = _init_upsampling_block(keys[5], 1280, 960, 512)
        self.up2 = _init_upsampling_block(keys[6], 512, 256, 256)
        self.up3 = _init_upsampling_block(keys[7], 256, 48, 128)
        self.up4 = _init_upsampling_block(keys[8], 128, 24, 64)
        self.up5 = _init_upsampling_block(keys[9], 64, 3, 16)
        w3, b3 = _init_conv(keys[10], 1, 1, 16, out_channels)
        self.conv3_w, self.conv3_b = w3, b3
        # NOTE: Python-side cache of first-pass features (matches the PyTorch
        # module's behaviour). Not jit-friendly by design.
        self._mid_level_features = None

    def _backbone_forward(self, x_nhwc):
        feats = {"layer0": x_nhwc}
        B, H, W, C = x_nhwc.shape
        for i, (f, _) in enumerate(_BACKBONE_SPEC, start=1):
            pooled = x_nhwc.reshape(B, H // f, f, W // f, f, C).mean(axis=(2, 4))
            feats[f"layer{i}"] = conv_block_apply(self.backbone[f"layer{i}"],
                                                  pooled)
        return feats

    def __call__(self, x_nchw, second_prop=False):
        x = jnp.transpose(jnp.asarray(x_nchw, jnp.float32), (0, 2, 3, 1))
        if x.shape[-1] == 1:
            x = jnp.broadcast_to(x, (*x.shape[:-1], 3))

        feature_maps = self._backbone_forward(x)
        if not second_prop:
            self._mid_level_features = dict(feature_maps)
        if second_prop:
            for layer_num in range(len(self.thresholds)):
                name = f"layer{layer_num}"
                feature_maps[name] = threshold_diff(
                    feature_maps[name],
                    self._mid_level_features[name],
                    self.thresholds[f"threshold{layer_num}"])

        u1 = upsampling_block_apply(self.up1, feature_maps["layer4"],
                                    feature_maps["layer5"])
        u2 = upsampling_block_apply(self.up2, feature_maps["layer3"], u1)
        u3 = upsampling_block_apply(self.up3, feature_maps["layer2"], u2)
        u4 = upsampling_block_apply(self.up4, feature_maps["layer1"], u3)
        u5 = upsampling_block_apply(self.up5, feature_maps["layer0"], u4)

        ones = jnp.ones((self.conv3_w.shape[-1],), jnp.float32)
        pred = conv1x1_affine(u5, self.conv3_w[0, 0], ones, self.conv3_b,
                              "sigmoid", out_dtype=jnp.float32)
        return jnp.transpose(pred, (0, 3, 1, 2))  # back to NCHW


# ----------------------------------------------------------------------------
if __name__ == "__main__":
    key = jax.random.PRNGKey(0)
    pkey, xkey, x2key = jax.random.split(key, 3)

    out_channels = 2
    model = SiamThreshPallas(out_channels=out_channels, key=pkey)

    # NCHW input, spatial must be divisible by 32 (deepest pyramid level)
    x1 = jax.random.normal(xkey, (2, 3, 32, 32), jnp.float32)

    out1 = model(x1, second_prop=False)          # first pass: cache features
    out1 = jax.block_until_ready(out1)

    x2 = x1 + 0.5 * jax.random.normal(x2key, x1.shape, jnp.float32)
    out2 = model(x2, second_prop=True)           # second pass: thresholding
    out2 = jax.block_until_ready(out2)

    assert out1.shape == (2, out_channels, 32, 32), out1.shape
    assert out2.shape == (2, out_channels, 32, 32), out2.shape
    assert bool(jnp.all(jnp.isfinite(out1))) and bool(jnp.all(jnp.isfinite(out2)))
    assert bool(jnp.all((out1 >= 0) & (out1 <= 1)))  # sigmoid output

    print("KERNEL_OK")
</pallas_src>

<mosaic_0001>
module attributes {stable_mosaic.version = 11 : i64} {
  func.func @_matmul_affine_kernel(%arg0: i32, %arg1: i32, %arg2: i32, %arg3: memref<512x128xbf16, #tpu.memory_space<vmem>>, %arg4: memref<128x128xbf16, #tpu.memory_space<vmem>>, %arg5: memref<1x128xf32, #tpu.memory_space<vmem>>, %arg6: memref<1x128xf32, #tpu.memory_space<vmem>>, %arg7: memref<512x128xbf16, #tpu.memory_space<vmem>>, %arg8: memref<512x128xf32, #tpu.memory_space<vmem>>) attributes {dimension_semantics = [#tpu.dimension_semantics<parallel>, #tpu.dimension_semantics<parallel>, #tpu.dimension_semantics<arbitrary>], iteration_bounds = array<i64: 1, 1, 1>, scalar_prefetch = 0 : i64, scratch_operands = 1 : i64, tpu.core_type = #tpu.core_type<tc>, window_params = [{transform_indices = @transform_0, window_bounds = array<i64: 512, 128>}, {transform_indices = @transform_1, window_bounds = array<i64: 128, 128>}, {transform_indices = @transform_2, window_bounds = array<i64: 1, 128>}, {transform_indices = @transform_3, window_bounds = array<i64: 1, 128>}, {transform_indices = @transform_4, window_bounds = array<i64: 512, 128>}]} {
    %c0_i32 = arith.constant 0 : i32
    %0 = arith.cmpi eq, %arg2, %c0_i32 : i32
    %1 = arith.extui %0 : i1 to i32
    %c0_i32_0 = arith.constant 0 : i32
    %2 = arith.cmpi ne, %1, %c0_i32_0 : i32
    scf.if %2 {
      %cst_10 = arith.constant 0.000000e+00 : f32
      %12 = vector.broadcast %cst_10 : f32 to vector<512x128xf32>
      %c0_11 = arith.constant 0 : index
      %c0_12 = arith.constant 0 : index
      %13 = vector.load %arg8[%c0_11, %c0_12] : memref<512x128xf32, #tpu.memory_space<vmem>>, vector<512x128xf32>
      tpu.vector_store %arg8[%c0_11, %c0_12], %12 {strides = array<i32>} : memref<512x128xf32, #tpu.memory_space<vmem>>, vector<512x128xf32>,
    } else {
    }
    %c0 = arith.constant 0 : index
    %c0_1 = arith.constant 0 : index
    %3 = vector.load %arg8[%c0, %c0_1] : memref<512x128xf32, #tpu.memory_space<vmem>>, vector<512x128xf32>
    %c0_2 = arith.constant 0 : index
    %c0_3 = arith.constant 0 : index
    %4 = vector.load %arg3[%c0_2, %c0_3] : memref<512x128xbf16, #tpu.memory_space<vmem>>, vector<512x128xbf16>
    %c0_4 = arith.constant 0 : index
    %c0_5 = arith.constant 0 : index
    %5 = vector.load %arg4[%c0_4, %c0_5] : memref<128x128xbf16, #tpu.memory_space<vmem>>, vector<128x128xbf16>
    %cst = arith.constant dense<0.000000e+00> : vector<512x128xf32>
    %6 = tpu.matmul %4, %5, %cst {dimension_numbers = #tpu.dot_dimension_numbers<[1], [0], [0], [1], [0, 0, 1, 1], [], []>} : vector<512x128xbf16>, vector<128x128xbf16>, vector<512x128xf32> -> vector<512x128xf32>
    %7 = arith.addf %3, %6 : vector<512x128xf32>
    %c0_6 = arith.constant 0 : index
    %c0_7 = arith.constant 0 : index
    %8 = vector.load %arg8[%c0_6, %c0_7] : memref<512x128xf32, #tpu.memory_space<vmem>>, vector<512x128xf32>
    tpu.vector_store %arg8[%c0_6, %c0_7], %7 {strides = array<i32>} : memref<512x128xf32, #tpu.memory_space<vmem>>, vector<512x128xf32>,
    %c0_i32_8 = arith.constant 0 : i32
    %9 = arith.cmpi eq, %arg2, %c0_i32_8 : i32
    %10 = arith.extui %9 : i1 to i32
    %c0_i32_9 = arith.constant 0 : i32
    %11 = arith.cmpi ne, %10, %c0_i32_9 : i32
    scf.if %11 {
      %c0_10 = arith.constant 0 : index
      %c0_11 = arith.constant 0 : index
      %12 = vector.load %arg8[%c0_10, %c0_11] : memref<512x128xf32, #tpu.memory_space<vmem>>, vector<512x128xf32>
      %c0_12 = arith.constant 0 : index
      %c0_13 = arith.constant 0 : index
      %13 = vector.load %arg5[%c0_12, %c0_13] : memref<1x128xf32, #tpu.memory_space<vmem>>, vector<1x128xf32>
      %14 = vector.broadcast %13 : vector<1x128xf32> to vector<512x128xf32>
      %15 = arith.mulf %12, %14 : vector<512x128xf32>
      %c0_14 = arith.constant 0 : index
      %c0_15 = arith.constant 0 : index
      %16 = vector.load %arg6[%c0_14, %c0_15] : memref<1x128xf32, #tpu.memory_space<vmem>>, vector<1x128xf32>
      %17 = vector.broadcast %16 : vector<1x128xf32> to vector<512x128xf32>
      %18 = arith.addf %15, %17 : vector<512x128xf32>
      %cst_16 = arith.constant 0.000000e+00 : f32
      %19 = vector.broadcast %cst_16 : f32 to vector<512x128xf32>
      %20 = arith.maximumf %18, %19 : vector<512x128xf32>
      %21 = arith.truncf %20 : vector<512x128xf32> to vector<512x128xbf16>
      %c0_17 = arith.constant 0 : index
      %c0_18 = arith.constant 0 : index
      %22 = vector.load %arg7[%c0_17, %c0_18] : memref<512x128xbf16, #tpu.memory_space<vmem>>, vector<512x128xbf16>
      tpu.vector_store %arg7[%c0_17, %c0_18], %21 {strides = array<i32>} : memref<512x128xbf16, #tpu.memory_space<vmem>>, vector<512x128xbf16>,
    } else {
    }
    return
  }
  func.func @transform_0(%arg0: i32, %arg1: i32, %arg2: i32) -> (i32, i32) {
    %c0_i32 = arith.constant 0 : i32
    return %arg0, %arg2 : i32, i32
  }
  func.func @transform_1(%arg0: i32, %arg1: i32, %arg2: i32) -> (i32, i32) {
    %c0_i32 = arith.constant 0 : i32
    return %arg2, %arg1 : i32, i32
  }
  func.func @transform_2(%arg0: i32, %arg1: i32, %arg2: i32) -> (i32, i32) {
    %c0_i32 = arith.constant 0 : i32
    %c0_i32_0 = arith.constant 0 : i32
    return %c0_i32, %arg1 : i32, i32
  }
  func.func @transform_3(%arg0: i32, %arg1: i32, %arg2: i32) -> (i32, i32) {
    %c0_i32 = arith.constant 0 : i32
    %c0_i32_0 = arith.constant 0 : i32
    return %c0_i32, %arg1 : i32, i32
  }
  func.func @transform_4(%arg0: i32, %arg1: i32, %arg2: i32) -> (i32, i32) {
    %c0_i32 = arith.constant 0 : i32
    return %arg0, %arg1 : i32, i32
  }
}

</mosaic_0001>

<llo_original>
// kernel: tpu_custom_call.1
$region0: #{tpu_custom_call.1}
  #allocation0 [shape = 'u32[]', space=smem, size = 0x4, offset = 0x4, fixed_abs, tag = 'smem constant byte address 0x4 - core index']
  #allocation1 [shape = 'u32[72,128]{1,0:T(1,128)}', space=vmem, size = 0x9000, scoped, tag = 'internal scratch']
  #allocation2 [shape = 'f32[512,128]{1,0:T(8,128)}', space=vmem, size = 0x40000, scoped, tag = 'scratch operand']
  %s0 = inlined_call_operand.hbm [shape: bf16[512,128], index: 0, kind: input, shape index: {}]
  %s1 = inlined_call_operand.hbm [shape: bf16[128,128], index: 1, kind: input, shape index: {}]
  %s2 = inlined_call_operand.vmem [shape: f32[1,128], index: 2, kind: input, shape index: {}]
  %s3 = inlined_call_operand.vmem [shape: f32[1,128], index: 3, kind: input, shape index: {}]
  %s4 = inlined_call_operand.hbm [shape: bf16[512,128], index: 4, kind: output, shape index: {}]
  %s5 = sld [smem:[#allocation0]]
  $region42: #{tpu_custom_call.1} parent=0
    _
  %s7 = ssub.s32 1, %s5
  %s8 = scalar_select 0, %s7, %s5
  $region1: #{tpu_custom_call.1} parent=0
    #allocation3 [shape = 'u8[131072]{0}', space=vmem, size = 0x20000, scoped, tag = 'input window, operand 0, single buffered']
    #allocation4 [shape = 's32[1]{0}', space=sflag, size = 0x4, scoped, tag = 'scoped memory for tpu_custom_call.1']
    #allocation5 [shape = 's32[1]{0}', space=sflag, size = 0x4, scoped, tag = 'scoped memory for tpu_custom_call.1']
    #allocation6 [shape = 'u8[32768]{0}', space=vmem, size = 0x8000, scoped, tag = 'input window, operand 1, single buffered']
    #allocation7 [shape = 's32[1]{0}', space=sflag, size = 0x4, scoped, tag = 'scoped memory for tpu_custom_call.1']
    #allocation8 [shape = 'u8[131072]{0}', space=vmem, size = 0x20000, scoped, tag = 'output window, operand 0, single buffered']
    %9 = vsyncpa [#allocation4], 0
    %10 = vsyncpa [#allocation7], 0
    %11 = vsyncpa [#allocation5], 0
    // Predicated region
    $region2: #{tpu_custom_call.1} parent=1 // pred_check
      _
    $region3: #{tpu_custom_call.1} parent=1 // pred_check_branch
      %13 = sbr.rel (0) target = $region5
    $region4: #{tpu_custom_call.1} parent=1 // pred_region
      %15 = vsyncadd [#allocation4], 0
      %s16 = sshll.u32 %s0, 4
      %s17 = int_to_ptr.hbm [resolvable:$true] %s16
      %s18 = sshll.u32 [#allocation3], 4
      %s19 = int_to_ptr.vmem [resolvable:$true] %s18
      %24 = dma.hbm_to_vmem [thread:$0]  %s17, 4096, %s19, [#allocation4], 64, 64, 4
    $region5: #{tpu_custom_call.1} parent=1 // pred_fallthru
      _
    // Predicated region
    $region6: #{tpu_custom_call.1} parent=1 // pred_check
      _
    $region7: #{tpu_custom_call.1} parent=1 // pred_check_branch
      %26 = sbr.rel (0) target = $region9
    $region8: #{tpu_custom_call.1} parent=1 // pred_region
      %28 = vsyncadd [#allocation7], 0
      %s29 = sshll.u32 %s1, 4
      %s30 = int_to_ptr.hbm [resolvable:$true] %s29
      %s31 = sshll.u32 [#allocation6], 4
      %s32 = int_to_ptr.vmem [resolvable:$true] %s31
      %37 = dma.hbm_to_vmem [thread:$0]  %s30, 1024, %s32, [#allocation7], 64, 64, 4
    $region9: #{tpu_custom_call.1} parent=1 // pred_fallthru
      _
    // Predicated region
    $region10: #{tpu_custom_call.1} parent=1 // pred_check
      _
    $region11: #{tpu_custom_call.1} parent=1 // pred_check_branch
      %39 = sbr.rel (0) target = $region13
    $region12: #{tpu_custom_call.1} parent=1 // pred_region
      _
    $region13: #{tpu_custom_call.1} parent=1 // pred_fallthru
      _
    // Predicated region
    $region14: #{tpu_custom_call.1} parent=1 // pred_check
      _
    $region15: #{tpu_custom_call.1} parent=1 // pred_check_branch
      %41 = sbr.rel (0) target = $region17
    $region16: #{tpu_custom_call.1} parent=1 // pred_region
      _
    $region17: #{tpu_custom_call.1} parent=1 // pred_fallthru
      _
    // Predicated region
    $region18: #{tpu_custom_call.1} parent=1 // pred_check
      _
    $region19: #{tpu_custom_call.1} parent=1 // pred_check_branch
      %43 = sbr.rel (0) target = $region21
    $region20: #{tpu_custom_call.1} parent=1 // pred_region
      %45 = dma.done [#allocation4], 4096
    $region21: #{tpu_custom_call.1} parent=1 // pred_fallthru
      _
    // Predicated region
    $region22: #{tpu_custom_call.1} parent=1 // pred_check
      _
    $region23: #{tpu_custom_call.1} parent=1 // pred_check_branch
      %47 = sbr.rel (0) target = $region25
    $region24: #{tpu_custom_call.1} parent=1 // pred_region
      %49 = dma.done [#allocation7], 1024
    $region25: #{tpu_custom_call.1} parent=1 // pred_fallthru
      _
    %p50 = scmp.eq.s32.totalorder 0, 0
    // Predicated region
    $region26: #{tpu_custom_call.1} parent=1 // pred_check
      %p51 = pneg %p50
    $region27: #{tpu_custom_call.1} parent=1 // pred_check_branch
      %53 = sbr.rel (%p51) target = $region29
    $region28: #{tpu_custom_call.1} parent=1 // pred_region
      %54 = vst [vmem:[#allocation2] sm:$0xff] 0.0
      %55 = vst [vmem:[#allocation2 + $0x8] sm:$0xff] 0.0
      %56 = vst [vmem:[#allocation2 + $0x10] sm:$0xff] 0.0
      %57 = vst [vmem:[#allocation2 + $0x18] sm:$0xff] 0.0
      %58 = vst [vmem:[#allocation2 + $0x20] sm:$0xff] 0.0
      %59 = vst [vmem:[#allocation2 + $0x28] sm:$0xff] 0.0
      %60 = vst [vmem:[#allocation2 + $0x30] sm:$0xff] 0.0
      %61 = vst [vmem:[#allocation2 + $0x38] sm:$0xff] 0.0
      %62 = vst [vmem:[#allocation2 + $0x40] sm:$0xff] 0.0
      %63 = vst [vmem:[#allocation2 + $0x48] sm:$0xff] 0.0
      %64 = vst [vmem:[#allocation2 + $0x50] sm:$0xff] 0.0
      %65 = vst [vmem:[#allocation2 + $0x58] sm:$0xff] 0.0
      %66 = vst [vmem:[#allocation2 + $0x60] sm:$0xff] 0.0
      %67 = vst [vmem:[#allocation2 + $0x68] sm:$0xff] 0.0
      %68 = vst [vmem:[#allocation2 + $0x70] sm:$0xff] 0.0
      %69 = vst [vmem:[#allocation2 + $0x78] sm:$0xff] 0.0
      %70 = vst [vmem:[#allocation2 + $0x80] sm:$0xff] 0.0
      %71 = vst [vmem:[#allocation2 + $0x88] sm:$0xff] 0.0
      %72 = vst [vmem:[#allocation2 + $0x90] sm:$0xff] 0.0
      %73 = vst [vmem:[#allocation2 + $0x98] sm:$0xff] 0.0
      %74 = vst [vmem:[#allocation2 + $0xa0] sm:$0xff] 0.0
      %75 = vst [vmem:[#allocation2 + $0xa8] sm:$0xff] 0.0
      %76 = vst [vmem:[#allocation2 + $0xb0] sm:$0xff] 0.0
      %77 = vst [vmem:[#allocation2 + $0xb8] sm:$0xff] 0.0
      %78 = vst [vmem:[#allocation2 + $0xc0] sm:$0xff] 0.0
      %79 = vst [vmem:[#allocation2 + $0xc8] sm:$0xff] 0.0
      %80 = vst [vmem:[#allocation2 + $0xd0] sm:$0xff] 0.0
      %81 = vst [vmem:[#allocation2 + $0xd8] sm:$0xff] 0.0
      %82 = vst [vmem:[#allocation2 + $0xe0] sm:$0xff] 0.0
      %83 = vst [vmem:[#allocation2 + $0xe8] sm:$0xff] 0.0
      %84 = vst [vmem:[#allocation2 + $0xf0] sm:$0xff] 0.0
      %85 = vst [vmem:[#allocation2 + $0xf8] sm:$0xff] 0.0
      %86 = vst [vmem:[#allocation2 + $0x100] sm:$0xff] 0.0
      %87 = vst [vmem:[#allocation2 + $0x108] sm:$0xff] 0.0
      %88 = vst [vmem:[#allocation2 + $0x110] sm:$0xff] 0.0
      %89 = vst [vmem:[#allocation2 + $0x118] sm:$0xff] 0.0
      %90 = vst [vmem:[#allocation2 + $0x120] sm:$0xff] 0.0
      %91 = vst [vmem:[#allocation2 + $0x128] sm:$0xff] 0.0
      %92 = vst [vmem:[#allocation2 + $0x130] sm:$0xff] 0.0
      %93 = vst [vmem:[#allocation2 + $0x138] sm:$0xff] 0.0
      %94 = vst [vmem:[#allocation2 + $0x140] sm:$0xff] 0.0
      %95 = vst [vmem:[#allocation2 + $0x148] sm:$0xff] 0.0
      %96 = vst [vmem:[#allocation2 + $0x150] sm:$0xff] 0.0
      %97 = vst [vmem:[#allocation2 + $0x158] sm:$0xff] 0.0
      %98 = vst [vmem:[#allocation2 + $0x160] sm:$0xff] 0.0
      %99 = vst [vmem:[#allocation2 + $0x168] sm:$0xff] 0.0
      %100 = vst [vmem:[#allocation2 + $0x170] sm:$0xff] 0.0
      %101 = vst [vmem:[#allocation2 + $0x178] sm:$0xff] 0.0
      %102 = vst [vmem:[#allocation2 + $0x180] sm:$0xff] 0.0
      %103 = vst [vmem:[#allocation2 + $0x188] sm:$0xff] 0.0
      %104 = vst [vmem:[#allocation2 + $0x190] sm:$0xff] 0.0
      %105 = vst [vmem:[#allocation2 + $0x198] sm:$0xff] 0.0
      %106 = vst [vmem:[#allocation2 + $0x1a0] sm:$0xff] 0.0
      %107 = vst [vmem:[#allocation2 + $0x1a8] sm:$0xff] 0.0
      %108 = vst [vmem:[#allocation2 + $0x1b0] sm:$0xff] 0.0
      %109 = vst [vmem:[#allocation2 + $0x1b8] sm:$0xff] 0.0
      %110 = vst [vmem:[#allocation2 + $0x1c0] sm:$0xff] 0.0
      %111 = vst [vmem:[#allocation2 + $0x1c8] sm:$0xff] 0.0
      %112 = vst [vmem:[#allocation2 + $0x1d0] sm:$0xff] 0.0
      %113 = vst [vmem:[#allocation2 + $0x1d8] sm:$0xff] 0.0
      %114 = vst [vmem:[#allocation2 + $0x1e0] sm:$0xff] 0.0
      %115 = vst [vmem:[#allocation2 + $0x1e8] sm:$0xff] 0.0
      %116 = vst [vmem:[#allocation2 + $0x1f0] sm:$0xff] 0.0
      %117 = vst [vmem:[#allocation2 + $0x1f8] sm:$0xff] 0.0
    $region29: #{tpu_custom_call.1} parent=1 // pred_fallthru
      _
    %v118 = vld [vmem:[#allocation2] sm:$0xff]
    %v119 = vld [vmem:[#allocation2 + $0x8] sm:$0xff]
    %v120 = vld [vmem:[#allocation2 + $0x10] sm:$0xff]
    %v121 = vld [vmem:[#allocation2 + $0x18] sm:$0xff]
    %v122 = vld [vmem:[#allocation2 + $0x20] sm:$0xff]
    %v123 = vld [vmem:[#allocation2 + $0x28] sm:$0xff]
    %v124 = vld [vmem:[#allocation2 + $0x30] sm:$0xff]
    %v125 = vld [vmem:[#allocation2 + $0x38] sm:$0xff]
    %v126 = vld [vmem:[#allocation2 + $0x40] sm:$0xff]
    %v127 = vld [vmem:[#allocation2 + $0x48] sm:$0xff]
    %v128 = vld [vmem:[#allocation2 + $0x50] sm:$0xff]
    %v129 = vld [vmem:[#allocation2 + $0x58] sm:$0xff]
    %v130 = vld [vmem:[#allocation2 + $0x60] sm:$0xff]
    %v131 = vld [vmem:[#allocation2 + $0x68] sm:$0xff]
    %v132 = vld [vmem:[#allocation2 + $0x70] sm:$0xff]
    %v133 = vld [vmem:[#allocation2 + $0x78] sm:$0xff]
    %v134 = vld [vmem:[#allocation2 + $0x80] sm:$0xff]
    %v135 = vld [vmem:[#allocation2 + $0x88] sm:$0xff]
    %v136 = vld [vmem:[#allocation2 + $0x90] sm:$0xff]
    %v137 = vld [vmem:[#allocation2 + $0x98] sm:$0xff]
    %v138 = vld [vmem:[#allocation2 + $0xa0] sm:$0xff]
    %v139 = vld [vmem:[#allocation2 + $0xa8] sm:$0xff]
    %v140 = vld [vmem:[#allocation2 + $0xb0] sm:$0xff]
    %v141 = vld [vmem:[#allocation2 + $0xb8] sm:$0xff]
    %v142 = vld [vmem:[#allocation2 + $0xc0] sm:$0xff]
    %v143 = vld [vmem:[#allocation2 + $0xc8] sm:$0xff]
    %v144 = vld [vmem:[#allocation2 + $0xd0] sm:$0xff]
    %v145 = vld [vmem:[#allocation2 + $0xd8] sm:$0xff]
    %v146 = vld [vmem:[#allocation2 + $0xe0] sm:$0xff]
    %v147 = vld [vmem:[#allocation2 + $0xe8] sm:$0xff]
    %v148 = vld [vmem:[#allocation2 + $0xf0] sm:$0xff]
    %v149 = vld [vmem:[#allocation2 + $0xf8] sm:$0xff]
    %v150 = vld [vmem:[#allocation2 + $0x100] sm:$0xff]
    %v151 = vld [vmem:[#allocation2 + $0x108] sm:$0xff]
    %v152 = vld [vmem:[#allocation2 + $0x110] sm:$0xff]
    %v153 = vld [vmem:[#allocation2 + $0x118] sm:$0xff]
    %v154 = vld [vmem:[#allocation2 + $0x120] sm:$0xff]
    %v155 = vld [vmem:[#allocation2 + $0x128] sm:$0xff]
    %v156 = vld [vmem:[#allocation2 + $0x130] sm:$0xff]
    %v157 = vld [vmem:[#allocation2 + $0x138] sm:$0xff]
    %v158 = vld [vmem:[#allocation2 + $0x140] sm:$0xff]
    %v159 = vld [vmem:[#allocation2 + $0x148] sm:$0xff]
    %v160 = vld [vmem:[#allocation2 + $0x150] sm:$0xff]
    %v161 = vld [vmem:[#allocation2 + $0x158] sm:$0xff]
    %v162 = vld [vmem:[#allocation2 + $0x160] sm:$0xff]
    %v163 = vld [vmem:[#allocation2 + $0x168] sm:$0xff]
    %v164 = vld [vmem:[#allocation2 + $0x170] sm:$0xff]
    %v165 = vld [vmem:[#allocation2 + $0x178] sm:$0xff]
    %v166 = vld [vmem:[#allocation2 + $0x180] sm:$0xff]
    %v167 = vld [vmem:[#allocation2 + $0x188] sm:$0xff]
    %v168 = vld [vmem:[#allocation2 + $0x190] sm:$0xff]
    %v169 = vld [vmem:[#allocation2 + $0x198] sm:$0xff]
    %v170 = vld [vmem:[#allocation2 + $0x1a0] sm:$0xff]
    %v171 = vld [vmem:[#allocation2 + $0x1a8] sm:$0xff]
    %v172 = vld [vmem:[#allocation2 + $0x1b0] sm:$0xff]
    %v173 = vld [vmem:[#allocation2 + $0x1b8] sm:$0xff]
    %v174 = vld [vmem:[#allocation2 + $0x1c0] sm:$0xff]
    %v175 = vld [vmem:[#allocation2 + $0x1c8] sm:$0xff]
    %v176 = vld [vmem:[#allocation2 + $0x1d0] sm:$0xff]
    %v177 = vld [vmem:[#allocation2 + $0x1d8] sm:$0xff]
    %v178 = vld [vmem:[#allocation2 + $0x1e0] sm:$0xff]
    %v179 = vld [vmem:[#allocation2 + $0x1e8] sm:$0xff]
    %v180 = vld [vmem:[#allocation2 + $0x1f0] sm:$0xff]
    %v181 = vld [vmem:[#allocation2 + $0x1f8] sm:$0xff]
    %v182 = vld [vmem:[#allocation3] sm:$0xf]
    %v183 = vld [vmem:[#allocation3 + $0x4] sm:$0xf]
    %v184 = vld [vmem:[#allocation3 + $0x8] sm:$0xf]
    %v185 = vld [vmem:[#allocation3 + $0xc] sm:$0xf]
    %v186 = vld [vmem:[#allocation3 + $0x10] sm:$0xf]
    %v187 = vld [vmem:[#allocation3 + $0x14] sm:$0xf]
    %v188 = vld [vmem:[#allocation3 + $0x18] sm:$0xf]
    %v189 = vld [vmem:[#allocation3 + $0x1c] sm:$0xf]
    %v190 = vld [vmem:[#allocation3 + $0x20] sm:$0xf]
    %v191 = vld [vmem:[#allocation3 + $0x24] sm:$0xf]
    %v192 = vld [vmem:[#allocation3 + $0x28] sm:$0xf]
    %v193 = vld [vmem:[#allocation3 + $0x2c] sm:$0xf]
    %v194 = vld [vmem:[#allocation3 + $0x30] sm:$0xf]
    %v195 = vld [vmem:[#allocation3 + $0x34] sm:$0xf]
    %v196 = vld [vmem:[#allocation3 + $0x38] sm:$0xf]
    %v197 = vld [vmem:[#allocation3 + $0x3c] sm:$0xf]
    %v198 = vld [vmem:[#allocation3 + $0x40] sm:$0xf]
    %v199 = vld [vmem:[#allocation3 + $0x44] sm:$0xf]
    %v200 = vld [vmem:[#allocation3 + $0x48] sm:$0xf]
    %v201 = vld [vmem:[#allocation3 + $0x4c] sm:$0xf]
    %v202 = vld [vmem:[#allocation3 + $0x50] sm:$0xf]
    %v203 = vld [vmem:[#allocation3 + $0x54] sm:$0xf]
    %v204 = vld [vmem:[#allocation3 + $0x58] sm:$0xf]
    %v205 = vld [vmem:[#allocation3 + $0x5c] sm:$0xf]
    %v206 = vld [vmem:[#allocation3 + $0x60] sm:$0xf]
    %v207 = vld [vmem:[#allocation3 + $0x64] sm:$0xf]
    %v208 = vld [vmem:[#allocation3 + $0x68] sm:$0xf]
    %v209 = vld [vmem:[#allocation3 + $0x6c] sm:$0xf]
    %v210 = vld [vmem:[#allocation3 + $0x70] sm:$0xf]
    %v211 = vld [vmem:[#allocation3 + $0x74] sm:$0xf]
    %v212 = vld [vmem:[#allocation3 + $0x78] sm:$0xf]
    %v213 = vld [vmem:[#allocation3 + $0x7c] sm:$0xf]
    %v214 = vld [vmem:[#allocation3 + $0x80] sm:$0xf]
    %v215 = vld [vmem:[#allocation3 + $0x84] sm:$0xf]
    %v216 = vld [vmem:[#allocation3 + $0x88] sm:$0xf]
    %v217 = vld [vmem:[#allocation3 + $0x8c] sm:$0xf]
    %v218 = vld [vmem:[#allocation3 + $0x90] sm:$0xf]
    %v219 = vld [vmem:[#allocation3 + $0x94] sm:$0xf]
    %v220 = vld [vmem:[#allocation3 + $0x98] sm:$0xf]
    %v221 = vld [vmem:[#allocation3 + $0x9c] sm:$0xf]
    %v222 = vld [vmem:[#allocation3 + $0xa0] sm:$0xf]
    %v223 = vld [vmem:[#allocation3 + $0xa4] sm:$0xf]
    %v224 = vld [vmem:[#allocation3 + $0xa8] sm:$0xf]
    %v225 = vld [vmem:[#allocation3 + $0xac] sm:$0xf]
    %v226 = vld [vmem:[#allocation3 + $0xb0] sm:$0xf]
    %v227 = vld [vmem:[#allocation3 + $0xb4] sm:$0xf]
    %v228 = vld [vmem:[#allocation3 + $0xb8] sm:$0xf]
    %v229 = vld [vmem:[#allocation3 + $0xbc] sm:$0xf]
    %v230 = vld [vmem:[#allocation3 + $0xc0] sm:$0xf]
    %v231 = vld [vmem:[#allocation3 + $0xc4] sm:$0xf]
    %v232 = vld [vmem:[#allocation3 + $0xc8] sm:$0xf]
    %v233 = vld [vmem:[#allocation3 + $0xcc] sm:$0xf]
    %v234 = vld [vmem:[#allocation3 + $0xd0] sm:$0xf]
    %v235 = vld [vmem:[#allocation3 + $0xd4] sm:$0xf]
    %v236 = vld [vmem:[#allocation3 + $0xd8] sm:$0xf]
    %v237 = vld [vmem:[#allocation3 + $0xdc] sm:$0xf]
    %v238 = vld [vmem:[#allocation3 + $0xe0] sm:$0xf]
    %v239 = vld [vmem:[#allocation3 + $0xe4] sm:$0xf]
    %v240 = vld [vmem:[#allocation3 + $0xe8] sm:$0xf]
    %v241 = vld [vmem:[#allocation3 + $0xec] sm:$0xf]
    %v242 = vld [vmem:[#allocation3 + $0xf0] sm:$0xf]
    %v243 = vld [vmem:[#allocation3 + $0xf4] sm:$0xf]
    %v244 = vld [vmem:[#allocation3 + $0xf8] sm:$0xf]
    %v245 = vld [vmem:[#allocation3 + $0xfc] sm:$0xf]
    %v246 = vld [vmem:[#allocation6] sm:$0xf]
    %v247 = vld [vmem:[#allocation6 + $0x4] sm:$0xf]
    %v248 = vld [vmem:[#allocation6 + $0x8] sm:$0xf]
    %v249 = vld [vmem:[#allocation6 + $0xc] sm:$0xf]
    %v250 = vld [vmem:[#allocation6 + $0x10] sm:$0xf]
    %v251 = vld [vmem:[#allocation6 + $0x14] sm:$0xf]
    %v252 = vld [vmem:[#allocation6 + $0x18] sm:$0xf]
    %v253 = vld [vmem:[#allocation6 + $0x1c] sm:$0xf]
    %v254 = vld [vmem:[#allocation6 + $0x20] sm:$0xf]
    %v255 = vld [vmem:[#allocation6 + $0x24] sm:$0xf]
    %v256 = vld [vmem:[#allocation6 + $0x28] sm:$0xf]
    %v257 = vld [vmem:[#allocation6 + $0x2c] sm:$0xf]
    %v258 = vld [vmem:[#allocation6 + $0x30] sm:$0xf]
    %v259 = vld [vmem:[#allocation6 + $0x34] sm:$0xf]
    %v260 = vld [vmem:[#allocation6 + $0x38] sm:$0xf]
    %v261 = vld [vmem:[#allocation6 + $0x3c] sm:$0xf]
    %v326 = vunpack.c.l.b16 %v182
    %v327 = vunpack.c.l.b16 %v183
    %v328 = vunpack.c.l.b16 %v184
    %v329 = vunpack.c.l.b16 %v185
    %v330 = vunpack.c.l.b16 %v186
    %v331 = vunpack.c.l.b16 %v187
    %v332 = vunpack.c.l.b16 %v188
    %v333 = vunpack.c.l.b16 %v189
    %v334 = vunpack.c.l.b16 %v190
    %v335 = vunpack.c.l.b16 %v191
    %v336 = vunpack.c.l.b16 %v192
    %v337 = vunpack.c.l.b16 %v193
    %v338 = vunpack.c.l.b16 %v194
    %v339 = vunpack.c.l.b16 %v195
    %v340 = vunpack.c.l.b16 %v196
    %v341 = vunpack.c.l.b16 %v197
    %v342 = vunpack.c.l.b16 %v198
    %v343 = vunpack.c.l.b16 %v199
    %v344 = vunpack.c.l.b16 %v200
    %v345 = vunpack.c.l.b16 %v201
    %v346 = vunpack.c.l.b16 %v202
    %v347 = vunpack.c.l.b16 %v203
    %v348 = vunpack.c.l.b16 %v204
    %v349 = vunpack.c.l.b16 %v205
    %v350 = vunpack.c.l.b16 %v206
    %v351 = vunpack.c.l.b16 %v207
    %v352 = vunpack.c.l.b16 %v208
    %v353 = vunpack.c.l.b16 %v209
    %v354 = vunpack.c.l.b16 %v210
    %v355 = vunpack.c.l.b16 %v211
    %v356 = vunpack.c.l.b16 %v212
    %v357 = vunpack.c.l.b16 %v213
    %v358 = vunpack.c.l.b16 %v214
    %v359 = vunpack.c.l.b16 %v215
    %v360 = vunpack.c.l.b16 %v216
    %v361 = vunpack.c.l.b16 %v217
    %v362 = vunpack.c.l.b16 %v218
    %v363 = vunpack.c.l.b16 %v219
    %v364 = vunpack.c.l.b16 %v220
    %v365 = vunpack.c.l.b16 %v221
    %v366 = vunpack.c.l.b16 %v222
    %v367 = vunpack.c.l.b16 %v223
    %v368 = vunpack.c.l.b16 %v224
    %v369 = vunpack.c.l.b16 %v225
    %v370 = vunpack.c.l.b16 %v226
    %v371 = vunpack.c.l.b16 %v227
    %v372 = vunpack.c.l.b16 %v228
    %v373 = vunpack.c.l.b16 %v229
    %v374 = vunpack.c.l.b16 %v230
    %v375 = vunpack.c.l.b16 %v231
    %v376 = vunpack.c.l.b16 %v232
    %v377 = vunpack.c.l.b16 %v233
    %v378 = vunpack.c.l.b16 %v234
    %v379 = vunpack.c.l.b16 %v235
    %v380 = vunpack.c.l.b16 %v236
    %v381 = vunpack.c.l.b16 %v237
    %v382 = vunpack.c.l.b16 %v238
    %v383 = vunpack.c.l.b16 %v239
    %v384 = vunpack.c.l.b16 %v240
    %v385 = vunpack.c.l.b16 %v241
    %v386 = vunpack.c.l.b16 %v242
    %v387 = vunpack.c.l.b16 %v243
    %v388 = vunpack.c.l.b16 %v244
    %v389 = vunpack.c.l.b16 %v245
    %v390 = vpack.c.b16 %v327, %v326
    %v391 = vpack.c.b16 %v329, %v328
    %v392 = vpack.c.b16 %v331, %v330
    %v393 = vpack.c.b16 %v333, %v332
    %v394 = vpack.c.b16 %v335, %v334
    %v395 = vpack.c.b16 %v337, %v336
    %v396 = vpack.c.b16 %v339, %v338
    %v397 = vpack.c.b16 %v341, %v340
    %v398 = vpack.c.b16 %v343, %v342
    %v399 = vpack.c.b16 %v345, %v344
    %v400 = vpack.c.b16 %v347, %v346
    %v401 = vpack.c.b16 %v349, %v348
    %v402 = vpack.c.b16 %v351, %v350
    %v403 = vpack.c.b16 %v353, %v352
    %v404 = vpack.c.b16 %v355, %v354
    %v405 = vpack.c.b16 %v357, %v356
    %v406 = vpack.c.b16 %v359, %v358
    %v407 = vpack.c.b16 %v361, %v360
    %v408 = vpack.c.b16 %v363, %v362
    %v409 = vpack.c.b16 %v365, %v364
    %v410 = vpack.c.b16 %v367, %v366
    %v411 = vpack.c.b16 %v369, %v368
    %v412 = vpack.c.b16 %v371, %v370
    %v413 = vpack.c.b16 %v373, %v372
    %v414 = vpack.c.b16 %v375, %v374
    %v415 = vpack.c.b16 %v377, %v376
    %v416 = vpack.c.b16 %v379, %v378
    %v417 = vpack.c.b16 %v381, %v380
    %v418 = vpack.c.b16 %v383, %v382
    %v419 = vpack.c.b16 %v385, %v384
    %v420 = vpack.c.b16 %v387, %v386
    %v421 = vpack.c.b16 %v389, %v388
    %v470 = vunpack.c.l.b16 %v246
    %v471 = vunpack.c.l.b16 %v247
    %v472 = vunpack.c.l.b16 %v248
    %v473 = vunpack.c.l.b16 %v249
    %v474 = vunpack.c.l.b16 %v250
    %v475 = vunpack.c.l.b16 %v251
    %v476 = vunpack.c.l.b16 %v252
    %v477 = vunpack.c.l.b16 %v253
    %v478 = vunpack.c.l.b16 %v254
    %v479 = vunpack.c.l.b16 %v255
    %v480 = vunpack.c.l.b16 %v256
    %v481 = vunpack.c.l.b16 %v257
    %v482 = vunpack.c.l.b16 %v258
    %v483 = vunpack.c.l.b16 %v259
    %v484 = vunpack.c.l.b16 %v260
    %v485 = vunpack.c.l.b16 %v261
    %v486 = vpack.c.b16 %v471, %v470
    %v487 = vpack.c.b16 %v473, %v472
    %v488 = vpack.c.b16 %v475, %v474
    %v489 = vpack.c.b16 %v477, %v476
    %v490 = vpack.c.b16 %v479, %v478
    %v491 = vpack.c.b16 %v481, %v480
    %v492 = vpack.c.b16 %v483, %v482
    %v493 = vpack.c.b16 %v485, %v484
    %502 = vmatpush.bf16.msra.mxu0 %v493
    %503 = vmatpush.bf16.msra.mxu0 %v492
    %504 = vmatpush.bf16.msra.mxu0 %v491
    %505 = vmatpush.bf16.msra.mxu0 %v490
    %506 = vmatpush.bf16.msra.mxu0 %v489
    %507 = vmatpush.bf16.msra.mxu0 %v488
    %508 = vmatpush.bf16.msra.mxu0 %v487
    %509 = vmatpush.bf16.msra.mxu0 %v486
    %510 = vmatmul.bf16.gmra.mxu0 %v390
    %v511 = vpop.f32.mrf.mxu0
    %v512 = vadd.f32 0.0, %v511
    %v513 = vpop.f32.mrf.mxu0
    %v514 = vadd.f32 0.0, %v513
    %515 = vmatmul.bf16.gmra.mxu0 %v391
    %v516 = vpop.f32.mrf.mxu0
    %v517 = vadd.f32 0.0, %v516
    %v518 = vpop.f32.mrf.mxu0
    %v519 = vadd.f32 0.0, %v518
    %520 = vmatmul.bf16.gmra.mxu0 %v392
    %v521 = vpop.f32.mrf.mxu0
    %v522 = vadd.f32 0.0, %v521
    %v523 = vpop.f32.mrf.mxu0
    %v524 = vadd.f32 0.0, %v523
    %525 = vmatmul.bf16.gmra.mxu0 %v393
    %v526 = vpop.f32.mrf.mxu0
    %v527 = vadd.f32 0.0, %v526
    %v528 = vpop.f32.mrf.mxu0
    %v529 = vadd.f32 0.0, %v528
    %530 = vmatmul.bf16.gmra.mxu0 %v394
    %v531 = vpop.f32.mrf.mxu0
    %v532 = vadd.f32 0.0, %v531
    %v533 = vpop.f32.mrf.mxu0
    %v534 = vadd.f32 0.0, %v533
    %535 = vmatmul.bf16.gmra.mxu0 %v395
    %v536 = vpop.f32.mrf.mxu0
    %v537 = vadd.f32 0.0, %v536
    %v538 = vpop.f32.mrf.mxu0
    %v539 = vadd.f32 0.0, %v538
    %540 = vmatmul.bf16.gmra.mxu0 %v396
    %v541 = vpop.f32.mrf.mxu0
    %v542 = vadd.f32 0.0, %v541
    %v543 = vpop.f32.mrf.mxu0
    %v544 = vadd.f32 0.0, %v543
    %545 = vmatmul.bf16.gmra.mxu0 %v397
    %v546 = vpop.f32.mrf.mxu0
    %v547 = vadd.f32 0.0, %v546
    %v548 = vpop.f32.mrf.mxu0
    %v549 = vadd.f32 0.0, %v548
    %550 = vmatmul.bf16.gmra.mxu0 %v398
    %v551 = vpop.f32.mrf.mxu0
    %v552 = vadd.f32 0.0, %v551
    %v553 = vpop.f32.mrf.mxu0
    %v554 = vadd.f32 0.0, %v553
    %555 = vmatmul.bf16.gmra.mxu0 %v399
    %v556 = vpop.f32.mrf.mxu0
    %v557 = vadd.f32 0.0, %v556
    %v558 = vpop.f32.mrf.mxu0
    %v559 = vadd.f32 0.0, %v558
    %560 = vmatmul.bf16.gmra.mxu0 %v400
    %v561 = vpop.f32.mrf.mxu0
    %v562 = vadd.f32 0.0, %v561
    %v563 = vpop.f32.mrf.mxu0
    %v564 = vadd.f32 0.0, %v563
    %565 = vmatmul.bf16.gmra.mxu0 %v401
    %v566 = vpop.f32.mrf.mxu0
    %v567 = vadd.f32 0.0, %v566
    %v568 = vpop.f32.mrf.mxu0
    %v569 = vadd.f32 0.0, %v568
    %570 = vmatmul.bf16.gmra.mxu0 %v402
    %v571 = vpop.f32.mrf.mxu0
    %v572 = vadd.f32 0.0, %v571
    %v573 = vpop.f32.mrf.mxu0
    %v574 = vadd.f32 0.0, %v573
    %575 = vmatmul.bf16.gmra.mxu0 %v403
    %v576 = vpop.f32.mrf.mxu0
    %v577 = vadd.f32 0.0, %v576
    %v578 = vpop.f32.mrf.mxu0
    %v579 = vadd.f32 0.0, %v578
    %580 = vmatmul.bf16.gmra.mxu0 %v404
    %v581 = vpop.f32.mrf.mxu0
    %v582 = vadd.f32 0.0, %v581
    %v583 = vpop.f32.mrf.mxu0
    %v584 = vadd.f32 0.0, %v583
    %585 = vmatmul.bf16.gmra.mxu0 %v405
    %v586 = vpop.f32.mrf.mxu0
    %v587 = vadd.f32 0.0, %v586
    %v588 = vpop.f32.mrf.mxu0
    %v589 = vadd.f32 0.0, %v588
    %590 = vmatmul.bf16.gmra.mxu0 %v406
    %v591 = vpop.f32.mrf.mxu0
    %v592 = vadd.f32 0.0, %v591
    %v593 = vpop.f32.mrf.mxu0
    %v594 = vadd.f32 0.0, %v593
    %595 = vmatmul.bf16.gmra.mxu0 %v407
    %v596 = vpop.f32.mrf.mxu0
    %v597 = vadd.f32 0.0, %v596
    %v598 = vpop.f32.mrf.mxu0
    %v599 = vadd.f32 0.0, %v598
    %600 = vmatmul.bf16.gmra.mxu0 %v408
    %v601 = vpop.f32.mrf.mxu0
    %v602 = vadd.f32 0.0, %v601
    %v603 = vpop.f32.mrf.mxu0
    %v604 = vadd.f32 0.0, %v603
    %605 = vmatmul.bf16.gmra.mxu0 %v409
    %v606 = vpop.f32.mrf.mxu0
    %v607 = vadd.f32 0.0, %v606
    %v608 = vpop.f32.mrf.mxu0
    %v609 = vadd.f32 0.0, %v608
    %610 = vmatmul.bf16.gmra.mxu0 %v410
    %v611 = vpop.f32.mrf.mxu0
    %v612 = vadd.f32 0.0, %v611
    %v613 = vpop.f32.mrf.mxu0
    %v614 = vadd.f32 0.0, %v613
    %615 = vmatmul.bf16.gmra.mxu0 %v411
    %v616 = vpop.f32.mrf.mxu0
    %v617 = vadd.f32 0.0, %v616
    %v618 = vpop.f32.mrf.mxu0
    %v619 = vadd.f32 0.0, %v618
    %620 = vmatmul.bf16.gmra.mxu0 %v412
    %v621 = vpop.f32.mrf.mxu0
    %v622 = vadd.f32 0.0, %v621
    %v623 = vpop.f32.mrf.mxu0
    %v624 = vadd.f32 0.0, %v623
    %625 = vmatmul.bf16.gmra.mxu0 %v413
    %v626 = vpop.f32.mrf.mxu0
    %v627 = vadd.f32 0.0, %v626
    %v628 = vpop.f32.mrf.mxu0
    %v629 = vadd.f32 0.0, %v628
    %630 = vmatmul.bf16.gmra.mxu0 %v414
    %v631 = vpop.f32.mrf.mxu0
    %v632 = vadd.f32 0.0, %v631
    %v633 = vpop.f32.mrf.mxu0
    %v634 = vadd.f32 0.0, %v633
    %635 = vmatmul.bf16.gmra.mxu0 %v415
    %v636 = vpop.f32.mrf.mxu0
    %v637 = vadd.f32 0.0, %v636
    %v638 = vpop.f32.mrf.mxu0
    %v639 = vadd.f32 0.0, %v638
    %640 = vmatmul.bf16.gmra.mxu0 %v416
    %v641 = vpop.f32.mrf.mxu0
    %v642 = vadd.f32 0.0, %v641
    %v643 = vpop.f32.mrf.mxu0
    %v644 = vadd.f32 0.0, %v643
    %645 = vmatmul.bf16.gmra.mxu0 %v417
    %v646 = vpop.f32.mrf.mxu0
    %v647 = vadd.f32 0.0, %v646
    %v648 = vpop.f32.mrf.mxu0
    %v649 = vadd.f32 0.0, %v648
    %650 = vmatmul.bf16.gmra.mxu0 %v418
    %v651 = vpop.f32.mrf.mxu0
    %v652 = vadd.f32 0.0, %v651
    %v653 = vpop.f32.mrf.mxu0
    %v654 = vadd.f32 0.0, %v653
    %655 = vmatmul.bf16.gmra.mxu0 %v419
    %v656 = vpop.f32.mrf.mxu0
    %v657 = vadd.f32 0.0, %v656
    %v658 = vpop.f32.mrf.mxu0
    %v659 = vadd.f32 0.0, %v658
    %660 = vmatmul.bf16.gmra.mxu0 %v420
    %v661 = vpop.f32.mrf.mxu0
    %v662 = vadd.f32 0.0, %v661
    %v663 = vpop.f32.mrf.mxu0
    %v664 = vadd.f32 0.0, %v663
    %665 = vmatmul.bf16.gmra.mxu0 %v421
    %v666 = vpop.f32.mrf.mxu0
    %v667 = vadd.f32 0.0, %v666
    %v668 = vpop.f32.mrf.mxu0
    %v669 = vadd.f32 0.0, %v668
    %670 = vdwg.mxu0
    %v671 = vadd.f32 %v118, %v512
    %v672 = vadd.f32 %v119, %v514
    %v673 = vadd.f32 %v120, %v517
    %v674 = vadd.f32 %v121, %v519
    %v675 = vadd.f32 %v122, %v522
    %v676 = vadd.f32 %v123, %v524
    %v677 = vadd.f32 %v124, %v527
    %v678 = vadd.f32 %v125, %v529
    %v679 = vadd.f32 %v126, %v532
    %v680 = vadd.f32 %v127, %v534
    %v681 = vadd.f32 %v128, %v537
    %v682 = vadd.f32 %v129, %v539
    %v683 = vadd.f32 %v130, %v542
    %v684 = vadd.f32 %v131, %v544
    %v685 = vadd.f32 %v132, %v547
    %v686 = vadd.f32 %v133, %v549
    %v687 = vadd.f32 %v134, %v552
    %v688 = vadd.f32 %v135, %v554
    %v689 = vadd.f32 %v136, %v557
    %v690 = vadd.f32 %v137, %v559
    %v691 = vadd.f32 %v138, %v562
    %v692 = vadd.f32 %v139, %v564
    %v693 = vadd.f32 %v140, %v567
    %v694 = vadd.f32 %v141, %v569
    %v695 = vadd.f32 %v142, %v572
    %v696 = vadd.f32 %v143, %v574
    %v697 = vadd.f32 %v144, %v577
    %v698 = vadd.f32 %v145, %v579
    %v699 = vadd.f32 %v146, %v582
    %v700 = vadd.f32 %v147, %v584
    %v701 = vadd.f32 %v148, %v587
    %v702 = vadd.f32 %v149, %v589
    %v703 = vadd.f32 %v150, %v592
    %v704 = vadd.f32 %v151, %v594
    %v705 = vadd.f32 %v152, %v597
    %v706 = vadd.f32 %v153, %v599
    %v707 = vadd.f32 %v154, %v602
    %v708 = vadd.f32 %v155, %v604
    %v709 = vadd.f32 %v156, %v607
    %v710 = vadd.f32 %v157, %v609
    %v711 = vadd.f32 %v158, %v612
    %v712 = vadd.f32 %v159, %v614
    %v713 = vadd.f32 %v160, %v617
    %v714 = vadd.f32 %v161, %v619
    %v715 = vadd.f32 %v162, %v622
    %v716 = vadd.f32 %v163, %v624
    %v717 = vadd.f32 %v164, %v627
    %v718 = vadd.f32 %v165, %v629
    %v719 = vadd.f32 %v166, %v632
    %v720 = vadd.f32 %v167, %v634
    %v721 = vadd.f32 %v168, %v637
    %v722 = vadd.f32 %v169, %v639
    %v723 = vadd.f32 %v170, %v642
    %v724 = vadd.f32 %v171, %v644
    %v725 = vadd.f32 %v172, %v647
    %v726 = vadd.f32 %v173, %v649
    %v727 = vadd.f32 %v174, %v652
    %v728 = vadd.f32 %v175, %v654
    %v729 = vadd.f32 %v176, %v657
    %v730 = vadd.f32 %v177, %v659
    %v731 = vadd.f32 %v178, %v662
    %v732 = vadd.f32 %v179, %v664
    %v733 = vadd.f32 %v180, %v667
    %v734 = vadd.f32 %v181, %v669
    %735 = vst [vmem:[#allocation2] sm:$0xff] %v671
    %736 = vst [vmem:[#allocation2 + $0x8] sm:$0xff] %v672
    %737 = vst [vmem:[#allocation2 + $0x10] sm:$0xff] %v673
    %738 = vst [vmem:[#allocation2 + $0x18] sm:$0xff] %v674
    %739 = vst [vmem:[#allocation2 + $0x20] sm:$0xff] %v675
    %740 = vst [vmem:[#allocation2 + $0x28] sm:$0xff] %v676
    %741 = vst [vmem:[#allocation2 + $0x30] sm:$0xff] %v677
    %742 = vst [vmem:[#allocation2 + $0x38] sm:$0xff] %v678
    %743 = vst [vmem:[#allocation2 + $0x40] sm:$0xff] %v679
    %744 = vst [vmem:[#allocation2 + $0x48] sm:$0xff] %v680
    %745 = vst [vmem:[#allocation2 + $0x50] sm:$0xff] %v681
    %746 = vst [vmem:[#allocation2 + $0x58] sm:$0xff] %v682
    %747 = vst [vmem:[#allocation2 + $0x60] sm:$0xff] %v683
    %748 = vst [vmem:[#allocation2 + $0x68] sm:$0xff] %v684
    %749 = vst [vmem:[#allocation2 + $0x70] sm:$0xff] %v685
    %750 = vst [vmem:[#allocation2 + $0x78] sm:$0xff] %v686
    %751 = vst [vmem:[#allocation2 + $0x80] sm:$0xff] %v687
    %752 = vst [vmem:[#allocation2 + $0x88] sm:$0xff] %v688
    %753 = vst [vmem:[#allocation2 + $0x90] sm:$0xff] %v689
    %754 = vst [vmem:[#allocation2 + $0x98] sm:$0xff] %v690
    %755 = vst [vmem:[#allocation2 + $0xa0] sm:$0xff] %v691
    %756 = vst [vmem:[#allocation2 + $0xa8] sm:$0xff] %v692
    %757 = vst [vmem:[#allocation2 + $0xb0] sm:$0xff] %v693
    %758 = vst [vmem:[#allocation2 + $0xb8] sm:$0xff] %v694
    %759 = vst [vmem:[#allocation2 + $0xc0] sm:$0xff] %v695
    %760 = vst [vmem:[#allocation2 + $0xc8] sm:$0xff] %v696
    %761 = vst [vmem:[#allocation2 + $0xd0] sm:$0xff] %v697
    %762 = vst [vmem:[#allocation2 + $0xd8] sm:$0xff] %v698
    %763 = vst [vmem:[#allocation2 + $0xe0] sm:$0xff] %v699
    %764 = vst [vmem:[#allocation2 + $0xe8] sm:$0xff] %v700
    %765 = vst [vmem:[#allocation2 + $0xf0] sm:$0xff] %v701
    %766 = vst [vmem:[#allocation2 + $0xf8] sm:$0xff] %v702
    %767 = vst [vmem:[#allocation2 + $0x100] sm:$0xff] %v703
    %768 = vst [vmem:[#allocation2 + $0x108] sm:$0xff] %v704
    %769 = vst [vmem:[#allocation2 + $0x110] sm:$0xff] %v705
    %770 = vst [vmem:[#allocation2 + $0x118] sm:$0xff] %v706
    %771 = vst [vmem:[#allocation2 + $0x120] sm:$0xff] %v707
    %772 = vst [vmem:[#allocation2 + $0x128] sm:$0xff] %v708
    %773 = vst [vmem:[#allocation2 + $0x130] sm:$0xff] %v709
    %774 = vst [vmem:[#allocation2 + $0x138] sm:$0xff] %v710
    %775 = vst [vmem:[#allocation2 + $0x140] sm:$0xff] %v711
    %776 = vst [vmem:[#allocation2 + $0x148] sm:$0xff] %v712
    %777 = vst [vmem:[#allocation2 + $0x150] sm:$0xff] %v713
    %778 = vst [vmem:[#allocation2 + $0x158] sm:$0xff] %v714
    %779 = vst [vmem:[#allocation2 + $0x160] sm:$0xff] %v715
    %780 = vst [vmem:[#allocation2 + $0x168] sm:$0xff] %v716
    %781 = vst [vmem:[#allocation2 + $0x170] sm:$0xff] %v717
    %782 = vst [vmem:[#allocation2 + $0x178] sm:$0xff] %v718
    %783 = vst [vmem:[#allocation2 + $0x180] sm:$0xff] %v719
    %784 = vst [vmem:[#allocation2 + $0x188] sm:$0xff] %v720
    %785 = vst [vmem:[#allocation2 + $0x190] sm:$0xff] %v721
    %786 = vst [vmem:[#allocation2 + $0x198] sm:$0xff] %v722
    %787 = vst [vmem:[#allocation2 + $0x1a0] sm:$0xff] %v723
    %788 = vst [vmem:[#allocation2 + $0x1a8] sm:$0xff] %v724
    %789 = vst [vmem:[#allocation2 + $0x1b0] sm:$0xff] %v725
    %790 = vst [vmem:[#allocation2 + $0x1b8] sm:$0xff] %v726
    %791 = vst [vmem:[#allocation2 + $0x1c0] sm:$0xff] %v727
    %792 = vst [vmem:[#allocation2 + $0x1c8] sm:$0xff] %v728
    %793 = vst [vmem:[#allocation2 + $0x1d0] sm:$0xff] %v729
    %794 = vst [vmem:[#allocation2 + $0x1d8] sm:$0xff] %v730
    %795 = vst [vmem:[#allocation2 + $0x1e0] sm:$0xff] %v731
    %796 = vst [vmem:[#allocation2 + $0x1e8] sm:$0xff] %v732
    %797 = vst [vmem:[#allocation2 + $0x1f0] sm:$0xff] %v733
    %798 = vst [vmem:[#allocation2 + $0x1f8] sm:$0xff] %v734
    // Predicated region
    $region30: #{tpu_custom_call.1} parent=1 // pred_check
      %p799 = pneg %p50
    $region31: #{tpu_custom_call.1} parent=1 // pred_check_branch
      %801 = sbr.rel (%p799) target = $region33
    $region32: #{tpu_custom_call.1} parent=1 // pred_region
      %v802 = vld [vmem:[#allocation2] sm:$0xff]
      %v803 = vld [vmem:[#allocation2 + $0x8] sm:$0xff]
      %v804 = vld [vmem:[#allocation2 + $0x10] sm:$0xff]
      %v805 = vld [vmem:[#allocation2 + $0x18] sm:$0xff]
      %v806 = vld [vmem:[#allocation2 + $0x20] sm:$0xff]
      %v807 = vld [vmem:[#allocation2 + $0x28] sm:$0xff]
      %v808 = vld [vmem:[#allocation2 + $0x30] sm:$0xff]
      %v809 = vld [vmem:[#allocation2 + $0x38] sm:$0xff]
      %v810 = vld [vmem:[#allocation2 + $0x40] sm:$0xff]
      %v811 = vld [vmem:[#allocation2 + $0x48] sm:$0xff]
      %v812 = vld [vmem:[#allocation2 + $0x50] sm:$0xff]
      %v813 = vld [vmem:[#allocation2 + $0x58] sm:$0xff]
      %v814 = vld [vmem:[#allocation2 + $0x60] sm:$0xff]
      %v815 = vld [vmem:[#allocation2 + $0x68] sm:$0xff]
      %v816 = vld [vmem:[#allocation2 + $0x70] sm:$0xff]
      %v817 = vld [vmem:[#allocation2 + $0x78] sm:$0xff]
      %v818 = vld [vmem:[#allocation2 + $0x80] sm:$0xff]
      %v819 = vld [vmem:[#allocation2 + $0x88] sm:$0xff]
      %v820 = vld [vmem:[#allocation2 + $0x90] sm:$0xff]
      %v821 = vld [vmem:[#allocation2 + $0x98] sm:$0xff]
      %v822 = vld [vmem:[#allocation2 + $0xa0] sm:$0xff]
      %v823 = vld [vmem:[#allocation2 + $0xa8] sm:$0xff]
      %v824 = vld [vmem:[#allocation2 + $0xb0] sm:$0xff]
      %v825 = vld [vmem:[#allocation2 + $0xb8] sm:$0xff]
      %v826 = vld [vmem:[#allocation2 + $0xc0] sm:$0xff]
      %v827 = vld [vmem:[#allocation2 + $0xc8] sm:$0xff]
      %v828 = vld [vmem:[#allocation2 + $0xd0] sm:$0xff]
      %v829 = vld [vmem:[#allocation2 + $0xd8] sm:$0xff]
      %v830 = vld [vmem:[#allocation2 + $0xe0] sm:$0xff]
      %v831 = vld [vmem:[#allocation2 + $0xe8] sm:$0xff]
      %v832 = vld [vmem:[#allocation2 + $0xf0] sm:$0xff]
      %v833 = vld [vmem:[#allocation2 + $0xf8] sm:$0xff]
      %v834 = vld [vmem:[#allocation2 + $0x100] sm:$0xff]
      %v835 = vld [vmem:[#allocation2 + $0x108] sm:$0xff]
      %v836 = vld [vmem:[#allocation2 + $0x110] sm:$0xff]
      %v837 = vld [vmem:[#allocation2 + $0x118] sm:$0xff]
      %v838 = vld [vmem:[#allocation2 + $0x120] sm:$0xff]
      %v839 = vld [vmem:[#allocation2 + $0x128] sm:$0xff]
      %v840 = vld [vmem:[#allocation2 + $0x130] sm:$0xff]
      %v841 = vld [vmem:[#allocation2 + $0x138] sm:$0xff]
      %v842 = vld [vmem:[#allocation2 + $0x140] sm:$0xff]
      %v843 = vld [vmem:[#allocation2 + $0x148] sm:$0xff]
      %v844 = vld [vmem:[#allocation2 + $0x150] sm:$0xff]
      %v845 = vld [vmem:[#allocation2 + $0x158] sm:$0xff]
      %v846 = vld [vmem:[#allocation2 + $0x160] sm:$0xff]
      %v847 = vld [vmem:[#allocation2 + $0x168] sm:$0xff]
      %v848 = vld [vmem:[#allocation2 + $0x170] sm:$0xff]
      %v849 = vld [vmem:[#allocation2 + $0x178] sm:$0xff]
      %v850 = vld [vmem:[#allocation2 + $0x180] sm:$0xff]
      %v851 = vld [vmem:[#allocation2 + $0x188] sm:$0xff]
      %v852 = vld [vmem:[#allocation2 + $0x190] sm:$0xff]
      %v853 = vld [vmem:[#allocation2 + $0x198] sm:$0xff]
      %v854 = vld [vmem:[#allocation2 + $0x1a0] sm:$0xff]
      %v855 = vld [vmem:[#allocation2 + $0x1a8] sm:$0xff]
      %v856 = vld [vmem:[#allocation2 + $0x1b0] sm:$0xff]
      %v857 = vld [vmem:[#allocation2 + $0x1b8] sm:$0xff]
      %v858 = vld [vmem:[#allocation2 + $0x1c0] sm:$0xff]
      %v859 = vld [vmem:[#allocation2 + $0x1c8] sm:$0xff]
      %v860 = vld [vmem:[#allocation2 + $0x1d0] sm:$0xff]
      %v861 = vld [vmem:[#allocation2 + $0x1d8] sm:$0xff]
      %v862 = vld [vmem:[#allocation2 + $0x1e0] sm:$0xff]
      %v863 = vld [vmem:[#allocation2 + $0x1e8] sm:$0xff]
      %v864 = vld [vmem:[#allocation2 + $0x1f0] sm:$0xff]
      %v865 = vld [vmem:[#allocation2 + $0x1f8] sm:$0xff]
      %v866 = vld [vmem:[%s2] sm:$0x1]
      %v868 = vperm.slane %v866, 0
      %v870 = vmul.f32 %v802, %v868
      %v871 = vmul.f32 %v803, %v868
      %v872 = vmul.f32 %v804, %v868
      %v873 = vmul.f32 %v805, %v868
      %v874 = vmul.f32 %v806, %v868
      %v875 = vmul.f32 %v807, %v868
      %v876 = vmul.f32 %v808, %v868
      %v877 = vmul.f32 %v809, %v868
      %v878 = vmul.f32 %v810, %v868
      %v879 = vmul.f32 %v811, %v868
      %v880 = vmul.f32 %v812, %v868
      %v881 = vmul.f32 %v813, %v868
      %v882 = vmul.f32 %v814, %v868
      %v883 = vmul.f32 %v815, %v868
      %v884 = vmul.f32 %v816, %v868
      %v885 = vmul.f32 %v817, %v868
      %v886 = vmul.f32 %v818, %v868
      %v887 = vmul.f32 %v819, %v868
      %v888 = vmul.f32 %v820, %v868
      %v889 = vmul.f32 %v821, %v868
      %v890 = vmul.f32 %v822, %v868
      %v891 = vmul.f32 %v823, %v868
      %v892 = vmul.f32 %v824, %v868
      %v893 = vmul.f32 %v825, %v868
      %v894 = vmul.f32 %v826, %v868
      %v895 = vmul.f32 %v827, %v868
      %v896 = vmul.f32 %v828, %v868
      %v897 = vmul.f32 %v829, %v868
      %v898 = vmul.f32 %v830, %v868
      %v899 = vmul.f32 %v831, %v868
      %v900 = vmul.f32 %v832, %v868
      %v901 = vmul.f32 %v833, %v868
      %v902 = vmul.f32 %v834, %v868
      %v903 = vmul.f32 %v835, %v868
      %v904 = vmul.f32 %v836, %v868
      %v905 = vmul.f32 %v837, %v868
      %v906 = vmul.f32 %v838, %v868
      %v907 = vmul.f32 %v839, %v868
      %v908 = vmul.f32 %v840, %v868
      %v909 = vmul.f32 %v841, %v868
      %v910 = vmul.f32 %v842, %v868
      %v911 = vmul.f32 %v843, %v868
      %v912 = vmul.f32 %v844, %v868
      %v913 = vmul.f32 %v845, %v868
      %v914 = vmul.f32 %v846, %v868
      %v915 = vmul.f32 %v847, %v868
      %v916 = vmul.f32 %v848, %v868
      %v917 = vmul.f32 %v849, %v868
      %v918 = vmul.f32 %v850, %v868
      %v919 = vmul.f32 %v851, %v868
      %v920 = vmul.f32 %v852, %v868
      %v921 = vmul.f32 %v853, %v868
      %v922 = vmul.f32 %v854, %v868
      %v923 = vmul.f32 %v855, %v868
      %v924 = vmul.f32 %v856, %v868
      %v925 = vmul.f32 %v857, %v868
      %v926 = vmul.f32 %v858, %v868
      %v927 = vmul.f32 %v859, %v868
      %v928 = vmul.f32 %v860, %v868
      %v929 = vmul.f32 %v861, %v868
      %v930 = vmul.f32 %v862, %v868
      %v931 = vmul.f32 %v863, %v868
      %v932 = vmul.f32 %v864, %v868
      %v933 = vmul.f32 %v865, %v868
      %v934 = vld [vmem:[%s3] sm:$0x1]
      %v936 = vperm.slane %v934, 0
      %v938 = vadd.f32 %v870, %v936
      %v939 = vadd.f32 %v871, %v936
      %v940 = vadd.f32 %v872, %v936
      %v941 = vadd.f32 %v873, %v936
      %v942 = vadd.f32 %v874, %v936
      %v943 = vadd.f32 %v875, %v936
      %v944 = vadd.f32 %v876, %v936
      %v945 = vadd.f32 %v877, %v936
      %v946 = vadd.f32 %v878, %v936
      %v947 = vadd.f32 %v879, %v936
      %v948 = vadd.f32 %v880, %v936
      %v949 = vadd.f32 %v881, %v936
      %v950 = vadd.f32 %v882, %v936
      %v951 = vadd.f32 %v883, %v936
      %v952 = vadd.f32 %v884, %v936
      %v953 = vadd.f32 %v885, %v936
      %v954 = vadd.f32 %v886, %v936
      %v955 = vadd.f32 %v887, %v936
      %v956 = vadd.f32 %v888, %v936
      %v957 = vadd.f32 %v889, %v936
      %v958 = vadd.f32 %v890, %v936
      %v959 = vadd.f32 %v891, %v936
      %v960 = vadd.f32 %v892, %v936
      %v961 = vadd.f32 %v893, %v936
      %v962 = vadd.f32 %v894, %v936
      %v963 = vadd.f32 %v895, %v936
      %v964 = vadd.f32 %v896, %v936
      %v965 = vadd.f32 %v897, %v936
      %v966 = vadd.f32 %v898, %v936
      %v967 = vadd.f32 %v899, %v936
      %v968 = vadd.f32 %v900, %v936
      %v969 = vadd.f32 %v901, %v936
      %v970 = vadd.f32 %v902, %v936
      %v971 = vadd.f32 %v903, %v936
      %v972 = vadd.f32 %v904, %v936
      %v973 = vadd.f32 %v905, %v936
      %v974 = vadd.f32 %v906, %v936
      %v975 = vadd.f32 %v907, %v936
      %v976 = vadd.f32 %v908, %v936
      %v977 = vadd.f32 %v909, %v936
      %v978 = vadd.f32 %v910, %v936
      %v979 = vadd.f32 %v911, %v936
      %v980 = vadd.f32 %v912, %v936
      %v981 = vadd.f32 %v913, %v936
      %v982 = vadd.f32 %v914, %v936
      %v983 = vadd.f32 %v915, %v936
      %v984 = vadd.f32 %v916, %v936
      %v985 = vadd.f32 %v917, %v936
      %v986 = vadd.f32 %v918, %v936
      %v987 = vadd.f32 %v919, %v936
      %v988 = vadd.f32 %v920, %v936
      %v989 = vadd.f32 %v921, %v936
      %v990 = vadd.f32 %v922, %v936
      %v991 = vadd.f32 %v923, %v936
      %v992 = vadd.f32 %v924, %v936
      %v993 = vadd.f32 %v925, %v936
      %v994 = vadd.f32 %v926, %v936
      %v995 = vadd.f32 %v927, %v936
      %v996 = vadd.f32 %v928, %v936
      %v997 = vadd.f32 %v929, %v936
      %v998 = vadd.f32 %v930, %v936
      %v999 = vadd.f32 %v931, %v936
      %v1000 = vadd.f32 %v932, %v936
      %v1001 = vadd.f32 %v933, %v936
      %v1002 = vmax.f32 %v938, 0.0
      %v1003 = vmax.f32 %v939, 0.0
      %v1004 = vmax.f32 %v940, 0.0
      %v1005 = vmax.f32 %v941, 0.0
      %v1006 = vmax.f32 %v942, 0.0
      %v1007 = vmax.f32 %v943, 0.0
      %v1008 = vmax.f32 %v944, 0.0
      %v1009 = vmax.f32 %v945, 0.0
      %v1010 = vmax.f32 %v946, 0.0
      %v1011 = vmax.f32 %v947, 0.0
      %v1012 = vmax.f32 %v948, 0.0
      %v1013 = vmax.f32 %v949, 0.0
      %v1014 = vmax.f32 %v950, 0.0
      %v1015 = vmax.f32 %v951, 0.0
      %v1016 = vmax.f32 %v952, 0.0
      %v1017 = vmax.f32 %v953, 0.0
      %v1018 = vmax.f32 %v954, 0.0
      %v1019 = vmax.f32 %v955, 0.0
      %v1020 = vmax.f32 %v956, 0.0
      %v1021 = vmax.f32 %v957, 0.0
      %v1022 = vmax.f32 %v958, 0.0
      %v1023 = vmax.f32 %v959, 0.0
      %v1024 = vmax.f32 %v960, 0.0
      %v1025 = vmax.f32 %v961, 0.0
      %v1026 = vmax.f32 %v962, 0.0
      %v1027 = vmax.f32 %v963, 0.0
      %v1028 = vmax.f32 %v964, 0.0
      %v1029 = vmax.f32 %v965, 0.0
      %v1030 = vmax.f32 %v966, 0.0
      %v1031 = vmax.f32 %v967, 0.0
      %v1032 = vmax.f32 %v968, 0.0
      %v1033 = vmax.f32 %v969, 0.0
      %v1034 = vmax.f32 %v970, 0.0
      %v1035 = vmax.f32 %v971, 0.0
      %v1036 = vmax.f32 %v972, 0.0
      %v1037 = vmax.f32 %v973, 0.0
      %v1038 = vmax.f32 %v974, 0.0
      %v1039 = vmax.f32 %v975, 0.0
      %v1040 = vmax.f32 %v976, 0.0
      %v1041 = vmax.f32 %v977, 0.0
      %v1042 = vmax.f32 %v978, 0.0
      %v1043 = vmax.f32 %v979, 0.0
      %v1044 = vmax.f32 %v980, 0.0
      %v1045 = vmax.f32 %v981, 0.0
      %v1046 = vmax.f32 %v982, 0.0
      %v1047 = vmax.f32 %v983, 0.0
      %v1048 = vmax.f32 %v984, 0.0
      %v1049 = vmax.f32 %v985, 0.0
      %v1050 = vmax.f32 %v986, 0.0
      %v1051 = vmax.f32 %v987, 0.0
      %v1052 = vmax.f32 %v988, 0.0
      %v1053 = vmax.f32 %v989, 0.0
      %v1054 = vmax.f32 %v990, 0.0
      %v1055 = vmax.f32 %v991, 0.0
      %v1056 = vmax.f32 %v992, 0.0
      %v1057 = vmax.f32 %v993, 0.0
      %v1058 = vmax.f32 %v994, 0.0
      %v1059 = vmax.f32 %v995, 0.0
      %v1060 = vmax.f32 %v996, 0.0
      %v1061 = vmax.f32 %v997, 0.0
      %v1062 = vmax.f32 %v998, 0.0
      %v1063 = vmax.f32 %v999, 0.0
      %v1064 = vmax.f32 %v1000, 0.0
      %v1065 = vmax.f32 %v1001, 0.0
      %v1066 = vpack.c.bf16 %v1002, %v1002
      %v1067 = vpack.c.bf16 %v1003, %v1003
      %v1068 = vpack.c.bf16 %v1004, %v1004
      %v1069 = vpack.c.bf16 %v1005, %v1005
      %v1070 = vpack.c.bf16 %v1006, %v1006
      %v1071 = vpack.c.bf16 %v1007, %v1007
      %v1072 = vpack.c.bf16 %v1008, %v1008
      %v1073 = vpack.c.bf16 %v1009, %v1009
      %v1074 = vpack.c.bf16 %v1010, %v1010
      %v1075 = vpack.c.bf16 %v1011, %v1011
      %v1076 = vpack.c.bf16 %v1012, %v1012
      %v1077 = vpack.c.bf16 %v1013, %v1013
      %v1078 = vpack.c.bf16 %v1014, %v1014
      %v1079 = vpack.c.bf16 %v1015, %v1015
      %v1080 = vpack.c.bf16 %v1016, %v1016
      %v1081 = vpack.c.bf16 %v1017, %v1017
      %v1082 = vpack.c.bf16 %v1018, %v1018
      %v1083 = vpack.c.bf16 %v1019, %v1019
      %v1084 = vpack.c.bf16 %v1020, %v1020
      %v1085 = vpack.c.bf16 %v1021, %v1021
      %v1086 = vpack.c.bf16 %v1022, %v1022
      %v1087 = vpack.c.bf16 %v1023, %v1023
      %v1088 = vpack.c.bf16 %v1024, %v1024
      %v1089 = vpack.c.bf16 %v1025, %v1025
      %v1090 = vpack.c.bf16 %v1026, %v1026
      %v1091 = vpack.c.bf16 %v1027, %v1027
      %v1092 = vpack.c.bf16 %v1028, %v1028
      %v1093 = vpack.c.bf16 %v1029, %v1029
      %v1094 = vpack.c.bf16 %v1030, %v1030
      %v1095 = vpack.c.bf16 %v1031, %v1031
      %v1096 = vpack.c.bf16 %v1032, %v1032
      %v1097 = vpack.c.bf16 %v1033, %v1033
      %v1098 = vpack.c.bf16 %v1034, %v1034
      %v1099 = vpack.c.bf16 %v1035, %v1035
      %v1100 = vpack.c.bf16 %v1036, %v1036
      %v1101 = vpack.c.bf16 %v1037, %v1037
      %v1102 = vpack.c.bf16 %v1038, %v1038
      %v1103 = vpack.c.bf16 %v1039, %v1039
      %v1104 = vpack.c.bf16 %v1040, %v1040
      %v1105 = vpack.c.bf16 %v1041, %v1041
      %v1106 = vpack.c.bf16 %v1042, %v1042
      %v1107 = vpack.c.bf16 %v1043, %v1043
      %v1108 = vpack.c.bf16 %v1044, %v1044
      %v1109 = vpack.c.bf16 %v1045, %v1045
      %v1110 = vpack.c.bf16 %v1046, %v1046
      %v1111 = vpack.c.bf16 %v1047, %v1047
      %v1112 = vpack.c.bf16 %v1048, %v1048
      %v1113 = vpack.c.bf16 %v1049, %v1049
      %v1114 = vpack.c.bf16 %v1050, %v1050
      %v1115 = vpack.c.bf16 %v1051, %v1051
      %v1116 = vpack.c.bf16 %v1052, %v1052
      %v1117 = vpack.c.bf16 %v1053, %v1053
      %v1118 = vpack.c.bf16 %v1054, %v1054
      %v1119 = vpack.c.bf16 %v1055, %v1055
      %v1120 = vpack.c.bf16 %v1056, %v1056
      %v1121 = vpack.c.bf16 %v1057, %v1057
      %v1122 = vpack.c.bf16 %v1058, %v1058
      %v1123 = vpack.c.bf16 %v1059, %v1059
      %v1124 = vpack.c.bf16 %v1060, %v1060
      %v1125 = vpack.c.bf16 %v1061, %v1061
      %v1126 = vpack.c.bf16 %v1062, %v1062
      %v1127 = vpack.c.bf16 %v1063, %v1063
      %v1128 = vpack.c.bf16 %v1064, %v1064
      %v1129 = vpack.c.bf16 %v1065, %v1065
      %1130 = vst [vmem:[#allocation8] sm:$0xf] %v1066
      %1131 = vst [vmem:[#allocation8 + $0x4] sm:$0xf] %v1067
      %1132 = vst [vmem:[#allocation8 + $0x8] sm:$0xf] %v1068
      %1133 = vst [vmem:[#allocation8 + $0xc] sm:$0xf] %v1069
      %1134 = vst [vmem:[#allocation8 + $0x10] sm:$0xf] %v1070
      %1135 = vst [vmem:[#allocation8 + $0x14] sm:$0xf] %v1071
      %1136 = vst [vmem:[#allocation8 + $0x18] sm:$0xf] %v1072
      %1137 = vst [vmem:[#allocation8 + $0x1c] sm:$0xf] %v1073
      %1138 = vst [vmem:[#allocation8 + $0x20] sm:$0xf] %v1074
      %1139 = vst [vmem:[#allocation8 + $0x24] sm:$0xf] %v1075
      %1140 = vst [vmem:[#allocation8 + $0x28] sm:$0xf] %v1076
      %1141 = vst [vmem:[#allocation8 + $0x2c] sm:$0xf] %v1077
      %1142 = vst [vmem:[#allocation8 + $0x30] sm:$0xf] %v1078
      %1143 = vst [vmem:[#allocation8 + $0x34] sm:$0xf] %v1079
      %1144 = vst [vmem:[#allocation8 + $0x38] sm:$0xf] %v1080
      %1145 = vst [vmem:[#allocation8 + $0x3c] sm:$0xf] %v1081
      %1146 = vst [vmem:[#allocation8 + $0x40] sm:$0xf] %v1082
      %1147 = vst [vmem:[#allocation8 + $0x44] sm:$0xf] %v1083
      %1148 = vst [vmem:[#allocation8 + $0x48] sm:$0xf] %v1084
      %1149 = vst [vmem:[#allocation8 + $0x4c] sm:$0xf] %v1085
      %1150 = vst [vmem:[#allocation8 + $0x50] sm:$0xf] %v1086
      %1151 = vst [vmem:[#allocation8 + $0x54] sm:$0xf] %v1087
      %1152 = vst [vmem:[#allocation8 + $0x58] sm:$0xf] %v1088
      %1153 = vst [vmem:[#allocation8 + $0x5c] sm:$0xf] %v1089
      %1154 = vst [vmem:[#allocation8 + $0x60] sm:$0xf] %v1090
      %1155 = vst [vmem:[#allocation8 + $0x64] sm:$0xf] %v1091
      %1156 = vst [vmem:[#allocation8 + $0x68] sm:$0xf] %v1092
      %1157 = vst [vmem:[#allocation8 + $0x6c] sm:$0xf] %v1093
      %1158 = vst [vmem:[#allocation8 + $0x70] sm:$0xf] %v1094
      %1159 = vst [vmem:[#allocation8 + $0x74] sm:$0xf] %v1095
      %1160 = vst [vmem:[#allocation8 + $0x78] sm:$0xf] %v1096
      %1161 = vst [vmem:[#allocation8 + $0x7c] sm:$0xf] %v1097
      %1162 = vst [vmem:[#allocation8 + $0x80] sm:$0xf] %v1098
      %1163 = vst [vmem:[#allocation8 + $0x84] sm:$0xf] %v1099
      %1164 = vst [vmem:[#allocation8 + $0x88] sm:$0xf] %v1100
      %1165 = vst [vmem:[#allocation8 + $0x8c] sm:$0xf] %v1101
      %1166 = vst [vmem:[#allocation8 + $0x90] sm:$0xf] %v1102
      %1167 = vst [vmem:[#allocation8 + $0x94] sm:$0xf] %v1103
      %1168 = vst [vmem:[#allocation8 + $0x98] sm:$0xf] %v1104
      %1169 = vst [vmem:[#allocation8 + $0x9c] sm:$0xf] %v1105
      %1170 = vst [vmem:[#allocation8 + $0xa0] sm:$0xf] %v1106
      %1171 = vst [vmem:[#allocation8 + $0xa4] sm:$0xf] %v1107
      %1172 = vst [vmem:[#allocation8 + $0xa8] sm:$0xf] %v1108
      %1173 = vst [vmem:[#allocation8 + $0xac] sm:$0xf] %v1109
      %1174 = vst [vmem:[#allocation8 + $0xb0] sm:$0xf] %v1110
      %1175 = vst [vmem:[#allocation8 + $0xb4] sm:$0xf] %v1111
      %1176 = vst [vmem:[#allocation8 + $0xb8] sm:$0xf] %v1112
      %1177 = vst [vmem:[#allocation8 + $0xbc] sm:$0xf] %v1113
      %1178 = vst [vmem:[#allocation8 + $0xc0] sm:$0xf] %v1114
      %1179 = vst [vmem:[#allocation8 + $0xc4] sm:$0xf] %v1115
      %1180 = vst [vmem:[#allocation8 + $0xc8] sm:$0xf] %v1116
      %1181 = vst [vmem:[#allocation8 + $0xcc] sm:$0xf] %v1117
      %1182 = vst [vmem:[#allocation8 + $0xd0] sm:$0xf] %v1118
      %1183 = vst [vmem:[#allocation8 + $0xd4] sm:$0xf] %v1119
      %1184 = vst [vmem:[#allocation8 + $0xd8] sm:$0xf] %v1120
      %1185 = vst [vmem:[#allocation8 + $0xdc] sm:$0xf] %v1121
      %1186 = vst [vmem:[#allocation8 + $0xe0] sm:$0xf] %v1122
      %1187 = vst [vmem:[#allocation8 + $0xe4] sm:$0xf] %v1123
      %1188 = vst [vmem:[#allocation8 + $0xe8] sm:$0xf] %v1124
      %1189 = vst [vmem:[#allocation8 + $0xec] sm:$0xf] %v1125
      %1190 = vst [vmem:[#allocation8 + $0xf0] sm:$0xf] %v1126
      %1191 = vst [vmem:[#allocation8 + $0xf4] sm:$0xf] %v1127
      %1192 = vst [vmem:[#allocation8 + $0xf8] sm:$0xf] %v1128
      %1193 = vst [vmem:[#allocation8 + $0xfc] sm:$0xf] %v1129
    $region33: #{tpu_custom_call.1} parent=1 // pred_fallthru
      _
    // Predicated region
    $region34: #{tpu_custom_call.1} parent=1 // pred_check
      _
    $region35: #{tpu_custom_call.1} parent=1 // pred_check_branch
      %1195 = sbr.rel (0) target = $region37
    $region36: #{tpu_custom_call.1} parent=1 // pred_region
      %1197 = vsyncadd [#allocation5], 0
      %s1198 = sshll.u32 [#allocation8], 4
      %s1199 = int_to_ptr.vmem [resolvable:$true] %s1198
      %s1200 = sshll.u32 %s4, 4
      %s1201 = int_to_ptr.hbm [resolvable:$true] %s1200
      %1206 = dma.vmem_to_hbm [thread:$0]  %s1199, 4096, %s1201, [#allocation5], 64, 64, 4
    $region37: #{tpu_custom_call.1} parent=1 // pred_fallthru
      _
    // Predicated region
    $region38: #{tpu_custom_call.1} parent=1 // pred_check
      _
    $region39: #{tpu_custom_call.1} parent=1 // pred_check_branch
      %1208 = sbr.rel (0) target = $region41
    $region40: #{tpu_custom_call.1} parent=1 // pred_region
      %1210 = dma.done [#allocation5], 4096
    $region41: #{tpu_custom_call.1} parent=1 // pred_fallthru
      _
    %1211 = vsyncpa [#allocation4], 1
    %1212 = vsyncpa [#allocation7], 1
    %1213 = vsyncpa [#allocation5], 1

</llo_original>
